<compile_context>
chip_gen: v5e
topology: v5e:2x2
jax: 0.10.0
libtpu: 0.0.40
codegen_flags: <defaults>
</compile_context>

<pallas_src>
import math
from functools import partial

import numpy as np
import jax
import jax.numpy as jnp
from jax import lax
from jax.experimental import pallas as pl
from jax.experimental.pallas import tpu as pltpu


def _round_up(x, m):
    return ((x + m - 1) // m) * m


def _sanet_kernel(
    q_in_ref, k_in_ref,            # (1, Lq_pad, H), (1, Lk_pad, H)
    wq_ref, bq_ref,                # (H, H), (1, H)
    wk_ref, bk_ref,                # (H, H), (1, H)
    w1t_ref,                       # (mid+1, H): W1^T tiled per head, last row = ones
    b1_ref, w2d_ref,               # VMEM (mid, 1, 1) each
    b2d_ref,                       # SMEM (1,)
    bin_out_ref, attn_out_ref,     # (1, Lq_pad, Lk_pad) each
    qw_ref, kt_ref,                # scratch VMEM: ((mid+1)*Lq_pad, H), (H, Lk_pad)
    *, n_head: int, d_head: int, mid: int, lk_valid: int,
):
    f32 = jnp.float32
    _, lq_pad, lk_pad = bin_out_ref.shape

    # --- full-width projections: one lane-dense (L,H)@(H,H) MXU matmul each ---
    qproj = jnp.dot(q_in_ref[0], wq_ref[...], preferred_element_type=f32) + bq_ref[...]
    k_full = jnp.dot(k_in_ref[0], wk_ref[...], preferred_element_type=f32) + bk_ref[...]
    kt_ref[...] = k_full.T          # transpose once; head loop uses plain (M,K)@(K,N)

    # Build the stacked LHS for ALL heads in one full-lane-width VPU multiply:
    #   qw[(m*Lq + i), h*Dh + d] = qproj[i, h*Dh + d] * w1aug[m, d]
    w1t = w1t_ref[...]              # (mid+1, H), per-head-tiled
    qw_ref[...] = (qproj[None, :, :] * w1t[:, None, :]).reshape((mid + 1) * lq_pad, -1)

    b1 = b1_ref[...]                # (mid, 1, 1)
    w2d = w2d_ref[...]              # (mid, 1, 1)
    b2d = b2d_ref[0]
    inv_sqrt = 1.0 / math.sqrt(d_head)

    # Padded K columns project to the bias (non-zero): mask them out of the norm.
    if lk_valid < lk_pad:
        col = lax.broadcasted_iota(jnp.int32, (lq_pad, lk_pad), 1)
        col_mask = (col < lk_valid).astype(f32)
    else:
        col_mask = None

    bin_acc = jnp.zeros((lq_pad, lk_pad), f32)
    attn_acc = jnp.zeros((lq_pad, lk_pad), f32)

    # n_head == 8 is a fixed architectural constant -> static unroll with aligned
    # static slice offsets (d_head is a multiple of 8 -> sublane-aligned K slices).
    for h in range(n_head):
        lo = h * d_head

        # One matmul per head: gate hidden channels + raw-score channel stacked on M.
        big = jnp.dot(qw_ref[:, lo:lo + d_head], kt_ref[lo:lo + d_head, :],
                      preferred_element_type=f32)                # ((mid+1)*Lq, Lk)
        big = big.reshape(mid + 1, lq_pad, lk_pad)

        raw = big[mid]                                           # sum_d q_i . k_j
        hid = jnp.maximum(big[:mid] + b1, 0.0)                   # (mid, Lq, Lk)
        diff = jnp.sum(hid * w2d, axis=0) + b2d                  # class1 - class0
        binary = (diff > 0.0).astype(f32)

        attn = raw * inv_sqrt * binary
        if col_mask is not None:
            attn = attn * col_mask
        attn2 = attn * attn                                      # reused twice
        sumsq = jnp.sum(attn2, axis=-1, keepdims=True)           # (Lq_pad, 1)
        # (attn/||attn||)^2 == attn^2 * 1/sum(attn^2): drops the sqrt and the
        # full-tile divide.  approx=True would use the EUP slot; kept exact to
        # preserve the 1e-4 comparison tolerance against the f32 reference.
        inv = pl.reciprocal(jnp.maximum(sumsq, 1e-24), approx=False)

        bin_acc = bin_acc + binary
        attn_acc = attn_acc + attn2 * inv

    scale = 1.0 / n_head
    bin_out_ref[0] = bin_acc * scale
    attn_out_ref[0] = attn_acc * scale


@partial(jax.jit, static_argnames=("n_head",))
def sanet_forward(q_seq, k_seq, params, *, n_head=8):
    B, Lq, H = q_seq.shape
    _, Lk, _ = k_seq.shape
    d_head = H // n_head
    mid = max(d_head // 2, 1)

    lq_pad = _round_up(Lq, 8)
    lk_pad = _round_up(Lk, 128)      # lane-dense output stores

    q_pad = jnp.pad(q_seq, ((0, 0), (0, lq_pad - Lq), (0, 0)))
    k_pad = jnp.pad(k_seq, ((0, 0), (0, lk_pad - Lk), (0, 0)))

    wq, bq = params["wq"], params["bq"]
    wk, bk = params["wk"], params["bk"]
    w1, b1 = params["w1"], params["b1"]
    w2, b2 = params["w2"], params["b2"]

    # Parameter re-layout (pure glue).
    bq2 = bq.reshape(1, H)
    bk2 = bk.reshape(1, H)
    # (mid+1, Dh): rows 0..mid-1 = W1^T, last row = ones; tiled per head -> (mid+1, H)
    w1aug = jnp.concatenate([w1.T, jnp.ones((1, d_head), jnp.float32)], axis=0)
    w1aug_tiled = jnp.tile(w1aug, (1, n_head))
    b1_3 = b1.reshape(mid, 1, 1)
    w2d_3 = (w2[:, 1] - w2[:, 0]).reshape(mid, 1, 1)
    b2d = (b2[1] - b2[0]).reshape(1)

    kernel = partial(_sanet_kernel, n_head=n_head, d_head=d_head, mid=mid, lk_valid=Lk)
    smem_spec = pl.BlockSpec(memory_space=pltpu.MemorySpace.SMEM)

    out_shape = (
        jax.ShapeDtypeStruct((B, lq_pad, lk_pad), jnp.float32),
        jax.ShapeDtypeStruct((B, lq_pad, lk_pad), jnp.float32),
    )

    binary, attn = pl.pallas_call(
        kernel,
        out_shape=out_shape,
        grid_spec=pltpu.PrefetchScalarGridSpec(
            num_scalar_prefetch=0,
            grid=(B,),
            in_specs=[
                pl.BlockSpec((1, lq_pad, H), lambda b: (b, 0, 0)),        # q
                pl.BlockSpec((1, lk_pad, H), lambda b: (b, 0, 0)),        # k
                pl.BlockSpec((H, H), lambda b: (0, 0)),                   # Wq (full, lane-dense)
                pl.BlockSpec((1, H), lambda b: (0, 0)),                   # bq
                pl.BlockSpec((H, H), lambda b: (0, 0)),                   # Wk
                pl.BlockSpec((1, H), lambda b: (0, 0)),                   # bk
                pl.BlockSpec((mid + 1, H), lambda b: (0, 0)),             # W1^T (+ones row), tiled
                pl.BlockSpec((mid, 1, 1), lambda b: (0, 0, 0)),           # b1
                pl.BlockSpec((mid, 1, 1), lambda b: (0, 0, 0)),           # w2[:,1]-w2[:,0]
                smem_spec,                                                # b2 diff
            ],
            out_specs=[
                pl.BlockSpec((1, lq_pad, lk_pad), lambda b: (b, 0, 0)),
                pl.BlockSpec((1, lq_pad, lk_pad), lambda b: (b, 0, 0)),
            ],
            scratch_shapes=[
                pltpu.VMEM(((mid + 1) * lq_pad, H), jnp.float32),  # stacked Q * W1aug (all heads)
                pltpu.VMEM((H, lk_pad), jnp.float32),              # projected K, transposed
            ],
        ),
        compiler_params=pltpu.CompilerParams(dimension_semantics=("parallel",)),
    )(q_pad, k_pad, wq, bq2, wk, bk2, w1aug_tiled, b1_3, w2d_3, b2d)

    return binary[:, :Lq, :Lk], attn[:, :Lq, :Lk]


def init_params(key, hidden, n_head):
    """Deterministic synthetic params (nn.Linear-style uniform init), JAX (in, out) layout."""
    d_head = hidden // n_head
    mid = max(d_head // 2, 1)
    ks = jax.random.split(key, 8)

    def u(k, shape, fan_in):
        bound = 1.0 / math.sqrt(fan_in)
        return jax.random.uniform(k, shape, jnp.float32, -bound, bound)

    return dict(
        wq=u(ks[0], (hidden, hidden), hidden), bq=u(ks[1], (hidden,), hidden),
        wk=u(ks[2], (hidden, hidden), hidden), bk=u(ks[3], (hidden,), hidden),
        w1=u(ks[4], (d_head, mid), d_head),    b1=u(ks[5], (mid,), d_head),
        w2=u(ks[6], (mid, 2), mid),            b2=u(ks[7], (2,), mid),
    )


def sanet_reference(q_seq, k_seq, params, *, n_head=8):
    """Plain-JAX mirror of the PyTorch forward (eval mode), for verification."""
    B, Lq, H = q_seq.shape
    Lk = k_seq.shape[1]
    d_head = H // n_head
    hi = jax.lax.Precision.HIGHEST
    qp = jnp.einsum("blh,hd->bld", q_seq, params["wq"], precision=hi) + params["bq"]
    kp = jnp.einsum("blh,hd->bld", k_seq, params["wk"], precision=hi) + params["bk"]
    qh = qp.reshape(B, Lq, n_head, d_head).transpose(0, 2, 1, 3)
    kh = kp.reshape(B, Lk, n_head, d_head).transpose(0, 2, 1, 3)
    logit = qh[:, :, :, None, :] * kh[:, :, None, :, :]          # (B, nH, Lq, Lk, Dh)
    scores = logit.sum(-1) / math.sqrt(d_head)
    hid = jnp.maximum(
        jnp.einsum("bhijd,dm->bhijm", logit, params["w1"], precision=hi) + params["b1"], 0.0)
    out = jnp.einsum("bhijm,mc->bhijc", hid, params["w2"], precision=hi) + params["b2"]
    diff = out[..., 1] - out[..., 0]
    binary = (diff > 0.0).astype(jnp.float32)
    attn = scores * binary
    norm = jnp.sqrt(jnp.sum(attn * attn, axis=-1, keepdims=True))
    attn = (attn / jnp.maximum(norm, 1e-12)) ** 2
    # masks flagging entries far from the argmax decision boundary (robust comparison)
    elem_safe = jnp.all(jnp.abs(diff) > 1e-5, axis=1)            # (B, Lq, Lk)
    row_safe = jnp.all(jnp.abs(diff) > 1e-5, axis=(1, 3))        # (B, Lq)
    return binary.mean(axis=1), attn.mean(axis=1), elem_safe, row_safe


if __name__ == "__main__":
    B, L, H, N_HEAD = 2, 8, 64, 8          # hidden_size=64 -> d_head=8, MLP mid=4
    key = jax.random.PRNGKey(0)
    kq, kk, kp = jax.random.split(key, 3)
    q = jax.random.normal(kq, (B, L, H), jnp.float32)
    k = jax.random.normal(kk, (B, L, H), jnp.float32)
    params = init_params(kp, H, N_HEAD)

    binary, attn = jax.block_until_ready(sanet_forward(q, k, params, n_head=N_HEAD))

    rb, ra, elem_safe, row_safe = sanet_reference(q, k, params, n_head=N_HEAD)
    binary_np, attn_np = np.asarray(binary), np.asarray(attn)
    rb_np, ra_np = np.asarray(rb), np.asarray(ra)
    es, rs = np.asarray(elem_safe), np.asarray(row_safe)

    assert np.allclose(binary_np[es], rb_np[es], atol=1e-5), "binary mismatch"
    assert np.allclose(attn_np[rs], ra_np[rs], atol=1e-4, rtol=1e-4), "attn mismatch"
    print("KERNEL_OK")
</pallas_src>

<mosaic_0001>
module attributes {stable_mosaic.version = 11 : i64} {
  func.func @_sanet_kernel(%arg0: i32, %arg1: memref<1x8x64xf32, #tpu.memory_space<vmem>>, %arg2: memref<1x128x64xf32, #tpu.memory_space<vmem>>, %arg3: memref<64x64xf32, #tpu.memory_space<vmem>>, %arg4: memref<1x64xf32, #tpu.memory_space<vmem>>, %arg5: memref<64x64xf32, #tpu.memory_space<vmem>>, %arg6: memref<1x64xf32, #tpu.memory_space<vmem>>, %arg7: memref<5x64xf32, #tpu.memory_space<vmem>>, %arg8: memref<4x1x1xf32, #tpu.memory_space<vmem>>, %arg9: memref<4x1x1xf32, #tpu.memory_space<vmem>>, %arg10: memref<1xf32, #tpu.memory_space<smem>>, %arg11: memref<1x8x128xf32, #tpu.memory_space<vmem>>, %arg12: memref<1x8x128xf32, #tpu.memory_space<vmem>>, %arg13: memref<40x64xf32, #tpu.memory_space<vmem>>, %arg14: memref<64x128xf32, #tpu.memory_space<vmem>>) attributes {dimension_semantics = [#tpu.dimension_semantics<parallel>], iteration_bounds = array<i64: 2>, scalar_prefetch = 0 : i64, scratch_operands = 2 : i64, tpu.core_type = #tpu.core_type<tc>, window_params = [{transform_indices = @transform_0, window_bounds = array<i64: 1, 8, 64>}, {transform_indices = @transform_1, window_bounds = array<i64: 1, 128, 64>}, {pipeline_mode = #tpu.pipeline_mode<synchronous>, transform_indices = @transform_2, window_bounds = array<i64: 64, 64>}, {pipeline_mode = #tpu.pipeline_mode<synchronous>, transform_indices = @transform_3, window_bounds = array<i64: 1, 64>}, {pipeline_mode = #tpu.pipeline_mode<synchronous>, transform_indices = @transform_4, window_bounds = array<i64: 64, 64>}, {pipeline_mode = #tpu.pipeline_mode<synchronous>, transform_indices = @transform_5, window_bounds = array<i64: 1, 64>}, {pipeline_mode = #tpu.pipeline_mode<synchronous>, transform_indices = @transform_6, window_bounds = array<i64: 5, 64>}, {pipeline_mode = #tpu.pipeline_mode<synchronous>, transform_indices = @transform_7, window_bounds = array<i64: 4, 1, 1>}, {pipeline_mode = #tpu.pipeline_mode<synchronous>, transform_indices = @transform_8, window_bounds = array<i64: 4, 1, 1>}, {transform_indices = @transform_9, window_bounds = array<i64: 1>}, {transform_indices = @transform_10, window_bounds = array<i64: 1, 8, 128>}, {transform_indices = @transform_11, window_bounds = array<i64: 1, 8, 128>}]} {
    %c0 = arith.constant 0 : index
    %c0_0 = arith.constant 0 : index
    %c0_1 = arith.constant 0 : index
    %0 = vector.load %arg1[%c0, %c0_0, %c0_1] : memref<1x8x64xf32, #tpu.memory_space<vmem>>, vector<1x8x64xf32>
    %1 = vector.shape_cast %0 : vector<1x8x64xf32> to vector<8x64xf32>
    %c0_2 = arith.constant 0 : index
    %c0_3 = arith.constant 0 : index
    %2 = vector.load %arg3[%c0_2, %c0_3] : memref<64x64xf32, #tpu.memory_space<vmem>>, vector<64x64xf32>
    %cst = arith.constant dense<0.000000e+00> : vector<8x64xf32>
    %3 = tpu.matmul %1, %2, %cst {dimension_numbers = #tpu.dot_dimension_numbers<[1], [0], [0], [1], [0, 0, 1, 1], [], []>} : vector<8x64xf32>, vector<64x64xf32>, vector<8x64xf32> -> vector<8x64xf32>
    %c0_4 = arith.constant 0 : index
    %c0_5 = arith.constant 0 : index
    %4 = vector.load %arg4[%c0_4, %c0_5] : memref<1x64xf32, #tpu.memory_space<vmem>>, vector<1x64xf32>
    %5 = vector.broadcast %4 : vector<1x64xf32> to vector<8x64xf32>
    %6 = arith.addf %3, %5 : vector<8x64xf32>
    %c0_6 = arith.constant 0 : index
    %c0_7 = arith.constant 0 : index
    %c0_8 = arith.constant 0 : index
    %7 = vector.load %arg2[%c0_6, %c0_7, %c0_8] : memref<1x128x64xf32, #tpu.memory_space<vmem>>, vector<1x128x64xf32>
    %8 = vector.shape_cast %7 : vector<1x128x64xf32> to vector<128x64xf32>
    %c0_9 = arith.constant 0 : index
    %c0_10 = arith.constant 0 : index
    %9 = vector.load %arg5[%c0_9, %c0_10] : memref<64x64xf32, #tpu.memory_space<vmem>>, vector<64x64xf32>
    %cst_11 = arith.constant dense<0.000000e+00> : vector<128x64xf32>
    %10 = tpu.matmul %8, %9, %cst_11 {dimension_numbers = #tpu.dot_dimension_numbers<[1], [0], [0], [1], [0, 0, 1, 1], [], []>} : vector<128x64xf32>, vector<64x64xf32>, vector<128x64xf32> -> vector<128x64xf32>
    %c0_12 = arith.constant 0 : index
    %c0_13 = arith.constant 0 : index
    %11 = vector.load %arg6[%c0_12, %c0_13] : memref<1x64xf32, #tpu.memory_space<vmem>>, vector<1x64xf32>
    %12 = vector.broadcast %11 : vector<1x64xf32> to vector<128x64xf32>
    %13 = arith.addf %10, %12 : vector<128x64xf32>
    %14 = tpu.transpose %13, [1, 0] : vector<128x64xf32> -> vector<64x128xf32>
    %c0_14 = arith.constant 0 : index
    %c0_15 = arith.constant 0 : index
    %15 = vector.load %arg14[%c0_14, %c0_15] : memref<64x128xf32, #tpu.memory_space<vmem>>, vector<64x128xf32>
    tpu.vector_store %arg14[%c0_14, %c0_15], %14 {strides = array<i32>} : memref<64x128xf32, #tpu.memory_space<vmem>>, vector<64x128xf32>,
    %c0_16 = arith.constant 0 : index
    %c0_17 = arith.constant 0 : index
    %16 = vector.load %arg7[%c0_16, %c0_17] : memref<5x64xf32, #tpu.memory_space<vmem>>, vector<5x64xf32>
    %17 = vector.shape_cast %6 : vector<8x64xf32> to vector<1x8x64xf32>
    %18 = vector.shape_cast %16 : vector<5x64xf32> to vector<5x1x64xf32>
    %19 = vector.broadcast %17 : vector<1x8x64xf32> to vector<5x8x64xf32>
    %20 = vector.broadcast %18 : vector<5x1x64xf32> to vector<5x8x64xf32>
    %21 = arith.mulf %19, %20 : vector<5x8x64xf32>
    %22 = vector.shape_cast %21 : vector<5x8x64xf32> to vector<40x64xf32>
    %c0_18 = arith.constant 0 : index
    %c0_19 = arith.constant 0 : index
    %23 = vector.load %arg13[%c0_18, %c0_19] : memref<40x64xf32, #tpu.memory_space<vmem>>, vector<40x64xf32>
    tpu.vector_store %arg13[%c0_18, %c0_19], %22 {strides = array<i32>} : memref<40x64xf32, #tpu.memory_space<vmem>>, vector<40x64xf32>,
    %c0_20 = arith.constant 0 : index
    %c0_21 = arith.constant 0 : index
    %c0_22 = arith.constant 0 : index
    %24 = vector.load %arg8[%c0_20, %c0_21, %c0_22] : memref<4x1x1xf32, #tpu.memory_space<vmem>>, vector<4x1x1xf32>
    %c0_23 = arith.constant 0 : index
    %c0_24 = arith.constant 0 : index
    %c0_25 = arith.constant 0 : index
    %25 = vector.load %arg9[%c0_23, %c0_24, %c0_25] : memref<4x1x1xf32, #tpu.memory_space<vmem>>, vector<4x1x1xf32>
    %c0_26 = arith.constant 0 : index
    %26 = memref.load %arg10[%c0_26] : memref<1xf32, #tpu.memory_space<smem>>
    %27 = tpu.iota {dimensions = array<i32: 1>} : vector<8x128xi32>
    %c8_i32 = arith.constant 8 : i32
    %28 = vector.broadcast %c8_i32 : i32 to vector<8x128xi32>
    %29 = arith.cmpi slt, %27, %28 : vector<8x128xi32>
    %30 = arith.extui %29 : vector<8x128xi1> to vector<8x128xi32>
    %31 = arith.sitofp %30 : vector<8x128xi32> to vector<8x128xf32>
    %cst_27 = arith.constant 0.000000e+00 : f32
    %32 = vector.broadcast %cst_27 : f32 to vector<8x128xf32>
    %cst_28 = arith.constant 0.000000e+00 : f32
    %33 = vector.broadcast %cst_28 : f32 to vector<8x128xf32>
    %c0_29 = arith.constant 0 : index
    %c0_30 = arith.constant 0 : index
    %34 = vector.load %arg13[%c0_29, %c0_30] : memref<40x64xf32, #tpu.memory_space<vmem>>, vector<40x8xf32>
    %c0_31 = arith.constant 0 : index
    %c0_32 = arith.constant 0 : index
    %35 = vector.load %arg14[%c0_31, %c0_32] : memref<64x128xf32, #tpu.memory_space<vmem>>, vector<8x128xf32>
    %cst_33 = arith.constant dense<0.000000e+00> : vector<40x128xf32>
    %36 = tpu.matmul %34, %35, %cst_33 {dimension_numbers = #tpu.dot_dimension_numbers<[1], [0], [0], [1], [0, 0, 1, 1], [], []>} : vector<40x8xf32>, vector<8x128xf32>, vector<40x128xf32> -> vector<40x128xf32>
    %37 = vector.shape_cast %36 : vector<40x128xf32> to vector<5x8x128xf32>
    %38 = vector.extract_strided_slice %37 {offsets = [4, 0, 0], sizes = [1, 8, 128], strides = [1, 1, 1]} : vector<5x8x128xf32> to vector<1x8x128xf32>
    %39 = vector.shape_cast %38 : vector<1x8x128xf32> to vector<8x128xf32>
    %40 = vector.extract_strided_slice %37 {offsets = [0, 0, 0], sizes = [4, 8, 128], strides = [1, 1, 1]} : vector<5x8x128xf32> to vector<4x8x128xf32>
    %41 = vector.broadcast %24 : vector<4x1x1xf32> to vector<4x8x128xf32>
    %42 = arith.addf %40, %41 : vector<4x8x128xf32>
    %cst_34 = arith.constant 0.000000e+00 : f32
    %43 = vector.broadcast %cst_34 : f32 to vector<4x8x128xf32>
    %44 = arith.maximumf %42, %43 : vector<4x8x128xf32>
    %45 = vector.broadcast %25 : vector<4x1x1xf32> to vector<4x8x128xf32>
    %46 = arith.mulf %44, %45 : vector<4x8x128xf32>
    %cst_35 = arith.constant dense<0.000000e+00> : vector<8x128xf32>
    %47 = vector.multi_reduction <add>, %46, %cst_35 [0] : vector<4x8x128xf32> to vector<8x128xf32>
    %48 = vector.broadcast %26 : f32 to vector<8x128xf32>
    %49 = arith.addf %47, %48 : vector<8x128xf32>
    %cst_36 = arith.constant 0.000000e+00 : f32
    %50 = vector.broadcast %cst_36 : f32 to vector<8x128xf32>
    %51 = arith.cmpf ogt, %49, %50 : vector<8x128xf32>
    %52 = arith.extui %51 : vector<8x128xi1> to vector<8x128xi32>
    %53 = arith.sitofp %52 : vector<8x128xi32> to vector<8x128xf32>
    %cst_37 = arith.constant 0.353553385 : f32
    %54 = vector.broadcast %cst_37 : f32 to vector<8x128xf32>
    %55 = arith.mulf %39, %54 : vector<8x128xf32>
    %56 = arith.mulf %55, %53 : vector<8x128xf32>
    %57 = arith.mulf %56, %31 : vector<8x128xf32>
    %58 = arith.mulf %57, %57 : vector<8x128xf32>
    %cst_38 = arith.constant dense<0.000000e+00> : vector<8xf32>
    %59 = vector.multi_reduction <add>, %58, %cst_38 [1] : vector<8x128xf32> to vector<8xf32>
    %60 = vector.shape_cast %59 : vector<8xf32> to vector<8x1xf32>
    %cst_39 = arith.constant 1.000000e-24 : f32
    %61 = vector.broadcast %cst_39 : f32 to vector<8x1xf32>
    %62 = arith.maximumf %60, %61 : vector<8x1xf32>
    %63 = tpu.reciprocal %62 : vector<8x1xf32> -> vector<8x1xf32>
    %64 = arith.addf %32, %53 : vector<8x128xf32>
    %65 = vector.broadcast %63 : vector<8x1xf32> to vector<8x128xf32>
    %66 = arith.mulf %58, %65 : vector<8x128xf32>
    %67 = arith.addf %33, %66 : vector<8x128xf32>
    %c0_40 = arith.constant 0 : index
    %c8 = arith.constant 8 : index
    %68 = vector.load %arg13[%c0_40, %c8] : memref<40x64xf32, #tpu.memory_space<vmem>>, vector<40x8xf32>
    %c8_41 = arith.constant 8 : index
    %c0_42 = arith.constant 0 : index
    %69 = vector.load %arg14[%c8_41, %c0_42] : memref<64x128xf32, #tpu.memory_space<vmem>>, vector<8x128xf32>
    %cst_43 = arith.constant dense<0.000000e+00> : vector<40x128xf32>
    %70 = tpu.matmul %68, %69, %cst_43 {dimension_numbers = #tpu.dot_dimension_numbers<[1], [0], [0], [1], [0, 0, 1, 1], [], []>} : vector<40x8xf32>, vector<8x128xf32>, vector<40x128xf32> -> vector<40x128xf32>
    %71 = vector.shape_cast %70 : vector<40x128xf32> to vector<5x8x128xf32>
    %72 = vector.extract_strided_slice %71 {offsets = [4, 0, 0], sizes = [1, 8, 128], strides = [1, 1, 1]} : vector<5x8x128xf32> to vector<1x8x128xf32>
    %73 = vector.shape_cast %72 : vector<1x8x128xf32> to vector<8x128xf32>
    %74 = vector.extract_strided_slice %71 {offsets = [0, 0, 0], sizes = [4, 8, 128], strides = [1, 1, 1]} : vector<5x8x128xf32> to vector<4x8x128xf32>
    %75 = vector.broadcast %24 : vector<4x1x1xf32> to vector<4x8x128xf32>
    %76 = arith.addf %74, %75 : vector<4x8x128xf32>
    %cst_44 = arith.constant 0.000000e+00 : f32
    %77 = vector.broadcast %cst_44 : f32 to vector<4x8x128xf32>
    %78 = arith.maximumf %76, %77 : vector<4x8x128xf32>
    %79 = vector.broadcast %25 : vector<4x1x1xf32> to vector<4x8x128xf32>
    %80 = arith.mulf %78, %79 : vector<4x8x128xf32>
    %cst_45 = arith.constant dense<0.000000e+00> : vector<8x128xf32>
    %81 = vector.multi_reduction <add>, %80, %cst_45 [0] : vector<4x8x128xf32> to vector<8x128xf32>
    %82 = vector.broadcast %26 : f32 to vector<8x128xf32>
    %83 = arith.addf %81, %82 : vector<8x128xf32>
    %cst_46 = arith.constant 0.000000e+00 : f32
    %84 = vector.broadcast %cst_46 : f32 to vector<8x128xf32>
    %85 = arith.cmpf ogt, %83, %84 : vector<8x128xf32>
    %86 = arith.extui %85 : vector<8x128xi1> to vector<8x128xi32>
    %87 = arith.sitofp %86 : vector<8x128xi32> to vector<8x128xf32>
    %cst_47 = arith.constant 0.353553385 : f32
    %88 = vector.broadcast %cst_47 : f32 to vector<8x128xf32>
    %89 = arith.mulf %73, %88 : vector<8x128xf32>
    %90 = arith.mulf %89, %87 : vector<8x128xf32>
    %91 = arith.mulf %90, %31 : vector<8x128xf32>
    %92 = arith.mulf %91, %91 : vector<8x128xf32>
    %cst_48 = arith.constant dense<0.000000e+00> : vector<8xf32>
    %93 = vector.multi_reduction <add>, %92, %cst_48 [1] : vector<8x128xf32> to vector<8xf32>
    %94 = vector.shape_cast %93 : vector<8xf32> to vector<8x1xf32>
    %cst_49 = arith.constant 1.000000e-24 : f32
    %95 = vector.broadcast %cst_49 : f32 to vector<8x1xf32>
    %96 = arith.maximumf %94, %95 : vector<8x1xf32>
    %97 = tpu.reciprocal %96 : vector<8x1xf32> -> vector<8x1xf32>
    %98 = arith.addf %64, %87 : vector<8x128xf32>
    %99 = vector.broadcast %97 : vector<8x1xf32> to vector<8x128xf32>
    %100 = arith.mulf %92, %99 : vector<8x128xf32>
    %101 = arith.addf %67, %100 : vector<8x128xf32>
    %c0_50 = arith.constant 0 : index
    %c16 = arith.constant 16 : index
    %102 = vector.load %arg13[%c0_50, %c16] : memref<40x64xf32, #tpu.memory_space<vmem>>, vector<40x8xf32>
    %c16_51 = arith.constant 16 : index
    %c0_52 = arith.constant 0 : index
    %103 = vector.load %arg14[%c16_51, %c0_52] : memref<64x128xf32, #tpu.memory_space<vmem>>, vector<8x128xf32>
    %cst_53 = arith.constant dense<0.000000e+00> : vector<40x128xf32>
    %104 = tpu.matmul %102, %103, %cst_53 {dimension_numbers = #tpu.dot_dimension_numbers<[1], [0], [0], [1], [0, 0, 1, 1], [], []>} : vector<40x8xf32>, vector<8x128xf32>, vector<40x128xf32> -> vector<40x128xf32>
    %105 = vector.shape_cast %104 : vector<40x128xf32> to vector<5x8x128xf32>
    %106 = vector.extract_strided_slice %105 {offsets = [4, 0, 0], sizes = [1, 8, 128], strides = [1, 1, 1]} : vector<5x8x128xf32> to vector<1x8x128xf32>
    %107 = vector.shape_cast %106 : vector<1x8x128xf32> to vector<8x128xf32>
    %108 = vector.extract_strided_slice %105 {offsets = [0, 0, 0], sizes = [4, 8, 128], strides = [1, 1, 1]} : vector<5x8x128xf32> to vector<4x8x128xf32>
    %109 = vector.broadcast %24 : vector<4x1x1xf32> to vector<4x8x128xf32>
    %110 = arith.addf %108, %109 : vector<4x8x128xf32>
    %cst_54 = arith.constant 0.000000e+00 : f32
    %111 = vector.broadcast %cst_54 : f32 to vector<4x8x128xf32>
    %112 = arith.maximumf %110, %111 : vector<4x8x128xf32>
    %113 = vector.broadcast %25 : vector<4x1x1xf32> to vector<4x8x128xf32>
    %114 = arith.mulf %112, %113 : vector<4x8x128xf32>
    %cst_55 = arith.constant dense<0.000000e+00> : vector<8x128xf32>
    %115 = vector.multi_reduction <add>, %114, %cst_55 [0] : vector<4x8x128xf32> to vector<8x128xf32>
    %116 = vector.broadcast %26 : f32 to vector<8x128xf32>
    %117 = arith.addf %115, %116 : vector<8x128xf32>
    %cst_56 = arith.constant 0.000000e+00 : f32
    %118 = vector.broadcast %cst_56 : f32 to vector<8x128xf32>
    %119 = arith.cmpf ogt, %117, %118 : vector<8x128xf32>
    %120 = arith.extui %119 : vector<8x128xi1> to vector<8x128xi32>
    %121 = arith.sitofp %120 : vector<8x128xi32> to vector<8x128xf32>
    %cst_57 = arith.constant 0.353553385 : f32
    %122 = vector.broadcast %cst_57 : f32 to vector<8x128xf32>
    %123 = arith.mulf %107, %122 : vector<8x128xf32>
    %124 = arith.mulf %123, %121 : vector<8x128xf32>
    %125 = arith.mulf %124, %31 : vector<8x128xf32>
    %126 = arith.mulf %125, %125 : vector<8x128xf32>
    %cst_58 = arith.constant dense<0.000000e+00> : vector<8xf32>
    %127 = vector.multi_reduction <add>, %126, %cst_58 [1] : vector<8x128xf32> to vector<8xf32>
    %128 = vector.shape_cast %127 : vector<8xf32> to vector<8x1xf32>
    %cst_59 = arith.constant 1.000000e-24 : f32
    %129 = vector.broadcast %cst_59 : f32 to vector<8x1xf32>
    %130 = arith.maximumf %128, %129 : vector<8x1xf32>
    %131 = tpu.reciprocal %130 : vector<8x1xf32> -> vector<8x1xf32>
    %132 = arith.addf %98, %121 : vector<8x128xf32>
    %133 = vector.broadcast %131 : vector<8x1xf32> to vector<8x128xf32>
    %134 = arith.mulf %126, %133 : vector<8x128xf32>
    %135 = arith.addf %101, %134 : vector<8x128xf32>
    %c0_60 = arith.constant 0 : index
    %c24 = arith.constant 24 : index
    %136 = vector.load %arg13[%c0_60, %c24] : memref<40x64xf32, #tpu.memory_space<vmem>>, vector<40x8xf32>
    %c24_61 = arith.constant 24 : index
    %c0_62 = arith.constant 0 : index
    %137 = vector.load %arg14[%c24_61, %c0_62] : memref<64x128xf32, #tpu.memory_space<vmem>>, vector<8x128xf32>
    %cst_63 = arith.constant dense<0.000000e+00> : vector<40x128xf32>
    %138 = tpu.matmul %136, %137, %cst_63 {dimension_numbers = #tpu.dot_dimension_numbers<[1], [0], [0], [1], [0, 0, 1, 1], [], []>} : vector<40x8xf32>, vector<8x128xf32>, vector<40x128xf32> -> vector<40x128xf32>
    %139 = vector.shape_cast %138 : vector<40x128xf32> to vector<5x8x128xf32>
    %140 = vector.extract_strided_slice %139 {offsets = [4, 0, 0], sizes = [1, 8, 128], strides = [1, 1, 1]} : vector<5x8x128xf32> to vector<1x8x128xf32>
    %141 = vector.shape_cast %140 : vector<1x8x128xf32> to vector<8x128xf32>
    %142 = vector.extract_strided_slice %139 {offsets = [0, 0, 0], sizes = [4, 8, 128], strides = [1, 1, 1]} : vector<5x8x128xf32> to vector<4x8x128xf32>
    %143 = vector.broadcast %24 : vector<4x1x1xf32> to vector<4x8x128xf32>
    %144 = arith.addf %142, %143 : vector<4x8x128xf32>
    %cst_64 = arith.constant 0.000000e+00 : f32
    %145 = vector.broadcast %cst_64 : f32 to vector<4x8x128xf32>
    %146 = arith.maximumf %144, %145 : vector<4x8x128xf32>
    %147 = vector.broadcast %25 : vector<4x1x1xf32> to vector<4x8x128xf32>
    %148 = arith.mulf %146, %147 : vector<4x8x128xf32>
    %cst_65 = arith.constant dense<0.000000e+00> : vector<8x128xf32>
    %149 = vector.multi_reduction <add>, %148, %cst_65 [0] : vector<4x8x128xf32> to vector<8x128xf32>
    %150 = vector.broadcast %26 : f32 to vector<8x128xf32>
    %151 = arith.addf %149, %150 : vector<8x128xf32>
    %cst_66 = arith.constant 0.000000e+00 : f32
    %152 = vector.broadcast %cst_66 : f32 to vector<8x128xf32>
    %153 = arith.cmpf ogt, %151, %152 : vector<8x128xf32>
    %154 = arith.extui %153 : vector<8x128xi1> to vector<8x128xi32>
    %155 = arith.sitofp %154 : vector<8x128xi32> to vector<8x128xf32>
    %cst_67 = arith.constant 0.353553385 : f32
    %156 = vector.broadcast %cst_67 : f32 to vector<8x128xf32>
    %157 = arith.mulf %141, %156 : vector<8x128xf32>
    %158 = arith.mulf %157, %155 : vector<8x128xf32>
    %159 = arith.mulf %158, %31 : vector<8x128xf32>
    %160 = arith.mulf %159, %159 : vector<8x128xf32>
    %cst_68 = arith.constant dense<0.000000e+00> : vector<8xf32>
    %161 = vector.multi_reduction <add>, %160, %cst_68 [1] : vector<8x128xf32> to vector<8xf32>
    %162 = vector.shape_cast %161 : vector<8xf32> to vector<8x1xf32>
    %cst_69 = arith.constant 1.000000e-24 : f32
    %163 = vector.broadcast %cst_69 : f32 to vector<8x1xf32>
    %164 = arith.maximumf %162, %163 : vector<8x1xf32>
    %165 = tpu.reciprocal %164 : vector<8x1xf32> -> vector<8x1xf32>
    %166 = arith.addf %132, %155 : vector<8x128xf32>
    %167 = vector.broadcast %165 : vector<8x1xf32> to vector<8x128xf32>
    %168 = arith.mulf %160, %167 : vector<8x128xf32>
    %169 = arith.addf %135, %168 : vector<8x128xf32>
    %c0_70 = arith.constant 0 : index
    %c32 = arith.constant 32 : index
    %170 = vector.load %arg13[%c0_70, %c32] : memref<40x64xf32, #tpu.memory_space<vmem>>, vector<40x8xf32>
    %c32_71 = arith.constant 32 : index
    %c0_72 = arith.constant 0 : index
    %171 = vector.load %arg14[%c32_71, %c0_72] : memref<64x128xf32, #tpu.memory_space<vmem>>, vector<8x128xf32>
    %cst_73 = arith.constant dense<0.000000e+00> : vector<40x128xf32>
    %172 = tpu.matmul %170, %171, %cst_73 {dimension_numbers = #tpu.dot_dimension_numbers<[1], [0], [0], [1], [0, 0, 1, 1], [], []>} : vector<40x8xf32>, vector<8x128xf32>, vector<40x128xf32> -> vector<40x128xf32>
    %173 = vector.shape_cast %172 : vector<40x128xf32> to vector<5x8x128xf32>
    %174 = vector.extract_strided_slice %173 {offsets = [4, 0, 0], sizes = [1, 8, 128], strides = [1, 1, 1]} : vector<5x8x128xf32> to vector<1x8x128xf32>
    %175 = vector.shape_cast %174 : vector<1x8x128xf32> to vector<8x128xf32>
    %176 = vector.extract_strided_slice %173 {offsets = [0, 0, 0], sizes = [4, 8, 128], strides = [1, 1, 1]} : vector<5x8x128xf32> to vector<4x8x128xf32>
    %177 = vector.broadcast %24 : vector<4x1x1xf32> to vector<4x8x128xf32>
    %178 = arith.addf %176, %177 : vector<4x8x128xf32>
    %cst_74 = arith.constant 0.000000e+00 : f32
    %179 = vector.broadcast %cst_74 : f32 to vector<4x8x128xf32>
    %180 = arith.maximumf %178, %179 : vector<4x8x128xf32>
    %181 = vector.broadcast %25 : vector<4x1x1xf32> to vector<4x8x128xf32>
    %182 = arith.mulf %180, %181 : vector<4x8x128xf32>
    %cst_75 = arith.constant dense<0.000000e+00> : vector<8x128xf32>
    %183 = vector.multi_reduction <add>, %182, %cst_75 [0] : vector<4x8x128xf32> to vector<8x128xf32>
    %184 = vector.broadcast %26 : f32 to vector<8x128xf32>
    %185 = arith.addf %183, %184 : vector<8x128xf32>
    %cst_76 = arith.constant 0.000000e+00 : f32
    %186 = vector.broadcast %cst_76 : f32 to vector<8x128xf32>
    %187 = arith.cmpf ogt, %185, %186 : vector<8x128xf32>
    %188 = arith.extui %187 : vector<8x128xi1> to vector<8x128xi32>
    %189 = arith.sitofp %188 : vector<8x128xi32> to vector<8x128xf32>
    %cst_77 = arith.constant 0.353553385 : f32
    %190 = vector.broadcast %cst_77 : f32 to vector<8x128xf32>
    %191 = arith.mulf %175, %190 : vector<8x128xf32>
    %192 = arith.mulf %191, %189 : vector<8x128xf32>
    %193 = arith.mulf %192, %31 : vector<8x128xf32>
    %194 = arith.mulf %193, %193 : vector<8x128xf32>
    %cst_78 = arith.constant dense<0.000000e+00> : vector<8xf32>
    %195 = vector.multi_reduction <add>, %194, %cst_78 [1] : vector<8x128xf32> to vector<8xf32>
    %196 = vector.shape_cast %195 : vector<8xf32> to vector<8x1xf32>
    %cst_79 = arith.constant 1.000000e-24 : f32
    %197 = vector.broadcast %cst_79 : f32 to vector<8x1xf32>
    %198 = arith.maximumf %196, %197 : vector<8x1xf32>
    %199 = tpu.reciprocal %198 : vector<8x1xf32> -> vector<8x1xf32>
    %200 = arith.addf %166, %189 : vector<8x128xf32>
    %201 = vector.broadcast %199 : vector<8x1xf32> to vector<8x128xf32>
    %202 = arith.mulf %194, %201 : vector<8x128xf32>
    %203 = arith.addf %169, %202 : vector<8x128xf32>
    %c0_80 = arith.constant 0 : index
    %c40 = arith.constant 40 : index
    %204 = vector.load %arg13[%c0_80, %c40] : memref<40x64xf32, #tpu.memory_space<vmem>>, vector<40x8xf32>
    %c40_81 = arith.constant 40 : index
    %c0_82 = arith.constant 0 : index
    %205 = vector.load %arg14[%c40_81, %c0_82] : memref<64x128xf32, #tpu.memory_space<vmem>>, vector<8x128xf32>
    %cst_83 = arith.constant dense<0.000000e+00> : vector<40x128xf32>
    %206 = tpu.matmul %204, %205, %cst_83 {dimension_numbers = #tpu.dot_dimension_numbers<[1], [0], [0], [1], [0, 0, 1, 1], [], []>} : vector<40x8xf32>, vector<8x128xf32>, vector<40x128xf32> -> vector<40x128xf32>
    %207 = vector.shape_cast %206 : vector<40x128xf32> to vector<5x8x128xf32>
    %208 = vector.extract_strided_slice %207 {offsets = [4, 0, 0], sizes = [1, 8, 128], strides = [1, 1, 1]} : vector<5x8x128xf32> to vector<1x8x128xf32>
    %209 = vector.shape_cast %208 : vector<1x8x128xf32> to vector<8x128xf32>
    %210 = vector.extract_strided_slice %207 {offsets = [0, 0, 0], sizes = [4, 8, 128], strides = [1, 1, 1]} : vector<5x8x128xf32> to vector<4x8x128xf32>
    %211 = vector.broadcast %24 : vector<4x1x1xf32> to vector<4x8x128xf32>
    %212 = arith.addf %210, %211 : vector<4x8x128xf32>
    %cst_84 = arith.constant 0.000000e+00 : f32
    %213 = vector.broadcast %cst_84 : f32 to vector<4x8x128xf32>
    %214 = arith.maximumf %212, %213 : vector<4x8x128xf32>
    %215 = vector.broadcast %25 : vector<4x1x1xf32> to vector<4x8x128xf32>
    %216 = arith.mulf %214, %215 : vector<4x8x128xf32>
    %cst_85 = arith.constant dense<0.000000e+00> : vector<8x128xf32>
    %217 = vector.multi_reduction <add>, %216, %cst_85 [0] : vector<4x8x128xf32> to vector<8x128xf32>
    %218 = vector.broadcast %26 : f32 to vector<8x128xf32>
    %219 = arith.addf %217, %218 : vector<8x128xf32>
    %cst_86 = arith.constant 0.000000e+00 : f32
    %220 = vector.broadcast %cst_86 : f32 to vector<8x128xf32>
    %221 = arith.cmpf ogt, %219, %220 : vector<8x128xf32>
    %222 = arith.extui %221 : vector<8x128xi1> to vector<8x128xi32>
    %223 = arith.sitofp %222 : vector<8x128xi32> to vector<8x128xf32>
    %cst_87 = arith.constant 0.353553385 : f32
    %224 = vector.broadcast %cst_87 : f32 to vector<8x128xf32>
    %225 = arith.mulf %209, %224 : vector<8x128xf32>
    %226 = arith.mulf %225, %223 : vector<8x128xf32>
    %227 = arith.mulf %226, %31 : vector<8x128xf32>
    %228 = arith.mulf %227, %227 : vector<8x128xf32>
    %cst_88 = arith.constant dense<0.000000e+00> : vector<8xf32>
    %229 = vector.multi_reduction <add>, %228, %cst_88 [1] : vector<8x128xf32> to vector<8xf32>
    %230 = vector.shape_cast %229 : vector<8xf32> to vector<8x1xf32>
    %cst_89 = arith.constant 1.000000e-24 : f32
    %231 = vector.broadcast %cst_89 : f32 to vector<8x1xf32>
    %232 = arith.maximumf %230, %231 : vector<8x1xf32>
    %233 = tpu.reciprocal %232 : vector<8x1xf32> -> vector<8x1xf32>
    %234 = arith.addf %200, %223 : vector<8x128xf32>
    %235 = vector.broadcast %233 : vector<8x1xf32> to vector<8x128xf32>
    %236 = arith.mulf %228, %235 : vector<8x128xf32>
    %237 = arith.addf %203, %236 : vector<8x128xf32>
    %c0_90 = arith.constant 0 : index
    %c48 = arith.constant 48 : index
    %238 = vector.load %arg13[%c0_90, %c48] : memref<40x64xf32, #tpu.memory_space<vmem>>, vector<40x8xf32>
    %c48_91 = arith.constant 48 : index
    %c0_92 = arith.constant 0 : index
    %239 = vector.load %arg14[%c48_91, %c0_92] : memref<64x128xf32, #tpu.memory_space<vmem>>, vector<8x128xf32>
    %cst_93 = arith.constant dense<0.000000e+00> : vector<40x128xf32>
    %240 = tpu.matmul %238, %239, %cst_93 {dimension_numbers = #tpu.dot_dimension_numbers<[1], [0], [0], [1], [0, 0, 1, 1], [], []>} : vector<40x8xf32>, vector<8x128xf32>, vector<40x128xf32> -> vector<40x128xf32>
    %241 = vector.shape_cast %240 : vector<40x128xf32> to vector<5x8x128xf32>
    %242 = vector.extract_strided_slice %241 {offsets = [4, 0, 0], sizes = [1, 8, 128], strides = [1, 1, 1]} : vector<5x8x128xf32> to vector<1x8x128xf32>
    %243 = vector.shape_cast %242 : vector<1x8x128xf32> to vector<8x128xf32>
    %244 = vector.extract_strided_slice %241 {offsets = [0, 0, 0], sizes = [4, 8, 128], strides = [1, 1, 1]} : vector<5x8x128xf32> to vector<4x8x128xf32>
    %245 = vector.broadcast %24 : vector<4x1x1xf32> to vector<4x8x128xf32>
    %246 = arith.addf %244, %245 : vector<4x8x128xf32>
    %cst_94 = arith.constant 0.000000e+00 : f32
    %247 = vector.broadcast %cst_94 : f32 to vector<4x8x128xf32>
    %248 = arith.maximumf %246, %247 : vector<4x8x128xf32>
    %249 = vector.broadcast %25 : vector<4x1x1xf32> to vector<4x8x128xf32>
    %250 = arith.mulf %248, %249 : vector<4x8x128xf32>
    %cst_95 = arith.constant dense<0.000000e+00> : vector<8x128xf32>
    %251 = vector.multi_reduction <add>, %250, %cst_95 [0] : vector<4x8x128xf32> to vector<8x128xf32>
    %252 = vector.broadcast %26 : f32 to vector<8x128xf32>
    %253 = arith.addf %251, %252 : vector<8x128xf32>
    %cst_96 = arith.constant 0.000000e+00 : f32
    %254 = vector.broadcast %cst_96 : f32 to vector<8x128xf32>
    %255 = arith.cmpf ogt, %253, %254 : vector<8x128xf32>
    %256 = arith.extui %255 : vector<8x128xi1> to vector<8x128xi32>
    %257 = arith.sitofp %256 : vector<8x128xi32> to vector<8x128xf32>
    %cst_97 = arith.constant 0.353553385 : f32
    %258 = vector.broadcast %cst_97 : f32 to vector<8x128xf32>
    %259 = arith.mulf %243, %258 : vector<8x128xf32>
    %260 = arith.mulf %259, %257 : vector<8x128xf32>
    %261 = arith.mulf %260, %31 : vector<8x128xf32>
    %262 = arith.mulf %261, %261 : vector<8x128xf32>
    %cst_98 = arith.constant dense<0.000000e+00> : vector<8xf32>
    %263 = vector.multi_reduction <add>, %262, %cst_98 [1] : vector<8x128xf32> to vector<8xf32>
    %264 = vector.shape_cast %263 : vector<8xf32> to vector<8x1xf32>
    %cst_99 = arith.constant 1.000000e-24 : f32
    %265 = vector.broadcast %cst_99 : f32 to vector<8x1xf32>
    %266 = arith.maximumf %264, %265 : vector<8x1xf32>
    %267 = tpu.reciprocal %266 : vector<8x1xf32> -> vector<8x1xf32>
    %268 = arith.addf %234, %257 : vector<8x128xf32>
    %269 = vector.broadcast %267 : vector<8x1xf32> to vector<8x128xf32>
    %270 = arith.mulf %262, %269 : vector<8x128xf32>
    %271 = arith.addf %237, %270 : vector<8x128xf32>
    %c0_100 = arith.constant 0 : index
    %c56 = arith.constant 56 : index
    %272 = vector.load %arg13[%c0_100, %c56] : memref<40x64xf32, #tpu.memory_space<vmem>>, vector<40x8xf32>
    %c56_101 = arith.constant 56 : index
    %c0_102 = arith.constant 0 : index
    %273 = vector.load %arg14[%c56_101, %c0_102] : memref<64x128xf32, #tpu.memory_space<vmem>>, vector<8x128xf32>
    %cst_103 = arith.constant dense<0.000000e+00> : vector<40x128xf32>
    %274 = tpu.matmul %272, %273, %cst_103 {dimension_numbers = #tpu.dot_dimension_numbers<[1], [0], [0], [1], [0, 0, 1, 1], [], []>} : vector<40x8xf32>, vector<8x128xf32>, vector<40x128xf32> -> vector<40x128xf32>
    %275 = vector.shape_cast %274 : vector<40x128xf32> to vector<5x8x128xf32>
    %276 = vector.extract_strided_slice %275 {offsets = [4, 0, 0], sizes = [1, 8, 128], strides = [1, 1, 1]} : vector<5x8x128xf32> to vector<1x8x128xf32>
    %277 = vector.shape_cast %276 : vector<1x8x128xf32> to vector<8x128xf32>
    %278 = vector.extract_strided_slice %275 {offsets = [0, 0, 0], sizes = [4, 8, 128], strides = [1, 1, 1]} : vector<5x8x128xf32> to vector<4x8x128xf32>
    %279 = vector.broadcast %24 : vector<4x1x1xf32> to vector<4x8x128xf32>
    %280 = arith.addf %278, %279 : vector<4x8x128xf32>
    %cst_104 = arith.constant 0.000000e+00 : f32
    %281 = vector.broadcast %cst_104 : f32 to vector<4x8x128xf32>
    %282 = arith.maximumf %280, %281 : vector<4x8x128xf32>
    %283 = vector.broadcast %25 : vector<4x1x1xf32> to vector<4x8x128xf32>
    %284 = arith.mulf %282, %283 : vector<4x8x128xf32>
    %cst_105 = arith.constant dense<0.000000e+00> : vector<8x128xf32>
    %285 = vector.multi_reduction <add>, %284, %cst_105 [0] : vector<4x8x128xf32> to vector<8x128xf32>
    %286 = vector.broadcast %26 : f32 to vector<8x128xf32>
    %287 = arith.addf %285, %286 : vector<8x128xf32>
    %cst_106 = arith.constant 0.000000e+00 : f32
    %288 = vector.broadcast %cst_106 : f32 to vector<8x128xf32>
    %289 = arith.cmpf ogt, %287, %288 : vector<8x128xf32>
    %290 = arith.extui %289 : vector<8x128xi1> to vector<8x128xi32>
    %291 = arith.sitofp %290 : vector<8x128xi32> to vector<8x128xf32>
    %cst_107 = arith.constant 0.353553385 : f32
    %292 = vector.broadcast %cst_107 : f32 to vector<8x128xf32>
    %293 = arith.mulf %277, %292 : vector<8x128xf32>
    %294 = arith.mulf %293, %291 : vector<8x128xf32>
    %295 = arith.mulf %294, %31 : vector<8x128xf32>
    %296 = arith.mulf %295, %295 : vector<8x128xf32>
    %cst_108 = arith.constant dense<0.000000e+00> : vector<8xf32>
    %297 = vector.multi_reduction <add>, %296, %cst_108 [1] : vector<8x128xf32> to vector<8xf32>
    %298 = vector.shape_cast %297 : vector<8xf32> to vector<8x1xf32>
    %cst_109 = arith.constant 1.000000e-24 : f32
    %299 = vector.broadcast %cst_109 : f32 to vector<8x1xf32>
    %300 = arith.maximumf %298, %299 : vector<8x1xf32>
    %301 = tpu.reciprocal %300 : vector<8x1xf32> -> vector<8x1xf32>
    %302 = arith.addf %268, %291 : vector<8x128xf32>
    %303 = vector.broadcast %301 : vector<8x1xf32> to vector<8x128xf32>
    %304 = arith.mulf %296, %303 : vector<8x128xf32>
    %305 = arith.addf %271, %304 : vector<8x128xf32>
    %cst_110 = arith.constant 1.250000e-01 : f32
    %306 = vector.broadcast %cst_110 : f32 to vector<8x128xf32>
    %307 = arith.mulf %302, %306 : vector<8x128xf32>
    %c0_111 = arith.constant 0 : index
    %c0_112 = arith.constant 0 : index
    %c0_113 = arith.constant 0 : index
    %308 = vector.load %arg11[%c0_111, %c0_112, %c0_113] : memref<1x8x128xf32, #tpu.memory_space<vmem>>, vector<1x8x128xf32>
    %309 = vector.shape_cast %308 : vector<1x8x128xf32> to vector<8x128xf32>
    %310 = vector.shape_cast %307 : vector<8x128xf32> to vector<1x8x128xf32>
    tpu.vector_store %arg11[%c0_111, %c0_112, %c0_113], %310 {strides = array<i32>} : memref<1x8x128xf32, #tpu.memory_space<vmem>>, vector<1x8x128xf32>,
    %cst_114 = arith.constant 1.250000e-01 : f32
    %311 = vector.broadcast %cst_114 : f32 to vector<8x128xf32>
    %312 = arith.mulf %305, %311 : vector<8x128xf32>
    %c0_115 = arith.constant 0 : index
    %c0_116 = arith.constant 0 : index
    %c0_117 = arith.constant 0 : index
    %313 = vector.load %arg12[%c0_115, %c0_116, %c0_117] : memref<1x8x128xf32, #tpu.memory_space<vmem>>, vector<1x8x128xf32>
    %314 = vector.shape_cast %313 : vector<1x8x128xf32> to vector<8x128xf32>
    %315 = vector.shape_cast %312 : vector<8x128xf32> to vector<1x8x128xf32>
    tpu.vector_store %arg12[%c0_115, %c0_116, %c0_117], %315 {strides = array<i32>} : memref<1x8x128xf32, #tpu.memory_space<vmem>>, vector<1x8x128xf32>,
    return
  }
  func.func @transform_0(%arg0: i32) -> (i32, i32, i32) {
    %c0_i32 = arith.constant 0 : i32
    %c0_i32_0 = arith.constant 0 : i32
    %c0_i32_1 = arith.constant 0 : i32
    return %arg0, %c0_i32, %c0_i32_0 : i32, i32, i32
  }
  func.func @transform_1(%arg0: i32) -> (i32, i32, i32) {
    %c0_i32 = arith.constant 0 : i32
    %c0_i32_0 = arith.constant 0 : i32
    %c0_i32_1 = arith.constant 0 : i32
    return %arg0, %c0_i32, %c0_i32_0 : i32, i32, i32
  }
  func.func @transform_2(%arg0: i32) -> (i32, i32) {
    %c0_i32 = arith.constant 0 : i32
    %c0_i32_0 = arith.constant 0 : i32
    %c0_i32_1 = arith.constant 0 : i32
    return %c0_i32, %c0_i32_0 : i32, i32
  }
  func.func @transform_3(%arg0: i32) -> (i32, i32) {
    %c0_i32 = arith.constant 0 : i32
    %c0_i32_0 = arith.constant 0 : i32
    %c0_i32_1 = arith.constant 0 : i32
    return %c0_i32, %c0_i32_0 : i32, i32
  }
  func.func @transform_4(%arg0: i32) -> (i32, i32) {
    %c0_i32 = arith.constant 0 : i32
    %c0_i32_0 = arith.constant 0 : i32
    %c0_i32_1 = arith.constant 0 : i32
    return %c0_i32, %c0_i32_0 : i32, i32
  }
  func.func @transform_5(%arg0: i32) -> (i32, i32) {
    %c0_i32 = arith.constant 0 : i32
    %c0_i32_0 = arith.constant 0 : i32
    %c0_i32_1 = arith.constant 0 : i32
    return %c0_i32, %c0_i32_0 : i32, i32
  }
  func.func @transform_6(%arg0: i32) -> (i32, i32) {
    %c0_i32 = arith.constant 0 : i32
    %c0_i32_0 = arith.constant 0 : i32
    %c0_i32_1 = arith.constant 0 : i32
    return %c0_i32, %c0_i32_0 : i32, i32
  }
  func.func @transform_7(%arg0: i32) -> (i32, i32, i32) {
    %c0_i32 = arith.constant 0 : i32
    %c0_i32_0 = arith.constant 0 : i32
    %c0_i32_1 = arith.constant 0 : i32
    %c0_i32_2 = arith.constant 0 : i32
    return %c0_i32, %c0_i32_0, %c0_i32_1 : i32, i32, i32
  }
  func.func @transform_8(%arg0: i32) -> (i32, i32, i32) {
    %c0_i32 = arith.constant 0 : i32
    %c0_i32_0 = arith.constant 0 : i32
    %c0_i32_1 = arith.constant 0 : i32
    %c0_i32_2 = arith.constant 0 : i32
    return %c0_i32, %c0_i32_0, %c0_i32_1 : i32, i32, i32
  }
  func.func @transform_9(%arg0: i32) -> i32 {
    %c0_i32 = arith.constant 0 : i32
    %c0_i32_0 = arith.constant 0 : i32
    return %c0_i32 : i32
  }
  func.func @transform_10(%arg0: i32) -> (i32, i32, i32) {
    %c0_i32 = arith.constant 0 : i32
    %c0_i32_0 = arith.constant 0 : i32
    %c0_i32_1 = arith.constant 0 : i32
    return %arg0, %c0_i32, %c0_i32_0 : i32, i32, i32
  }
  func.func @transform_11(%arg0: i32) -> (i32, i32, i32) {
    %c0_i32 = arith.constant 0 : i32
    %c0_i32_0 = arith.constant 0 : i32
    %c0_i32_1 = arith.constant 0 : i32
    return %arg0, %c0_i32, %c0_i32_0 : i32, i32, i32
  }
}

</mosaic_0001>

<llo_original>
// kernel: tile.9
$region0: #{tile.9}
  %s0 = inlined_call_operand.vmem [shape: f32[5,8,8], index: 0, kind: input, shape index: {}]
  %s1 = inlined_call_operand.vmem [shape: f32[5,64], index: 1, kind: output, shape index: {}]
  %v2 = vld [vmem:[%s0] ss:$8 sm:$0xf]
  %s3 = scalar_lea.vmem %s0, 28
  %v4 = vld [vmem:[%s3] sm:$0x10]
  %vm5 = vcmask 1044484
  %v6 = vsel %vm5, %v4, %v2
  %vm7 = vcmask 64512
  %8 = vst.msk [vmem:[%s1] sm:$0x1f] %vm7, %v6
  %s9 = scalar_lea.vmem %s0, 7
  %v10 = vld [vmem:[%s9] ss:$8 sm:$0xf]
  %s11 = scalar_lea.vmem %s0, 35
  %v12 = vld [vmem:[%s11] sm:$0x10]
  %vm13 = vcmask 1044484
  %v14 = vsel %vm13, %v12, %v10
  %15 = vrot.lane.b32.xlu0 %v14, 56
  %v16 = vpop.permute.xlu0 %15
  %vm17 = vcmask 523712
  %18 = vst.msk [vmem:[%s1] sm:$0x1f] %vm17, %v16
  %s19 = scalar_lea.vmem %s0, 6
  %v20 = vld [vmem:[%s19] ss:$8 sm:$0xf]
  %s21 = scalar_lea.vmem %s0, 34
  %v22 = vld [vmem:[%s21] sm:$0x10]
  %vm23 = vcmask 1044484
  %v24 = vsel %vm23, %v22, %v20
  %25 = vrot.lane.b32.xlu0 %v24, 48
  %v26 = vpop.permute.xlu0 %25
  %vm27 = vcmask 458112
  %28 = vst.msk [vmem:[%s1] sm:$0x1f] %vm27, %v26
  %s29 = scalar_lea.vmem %s0, 5
  %v30 = vld [vmem:[%s29] ss:$8 sm:$0xf]
  %s31 = scalar_lea.vmem %s0, 33
  %v32 = vld [vmem:[%s31] sm:$0x10]
  %vm33 = vcmask 1044484
  %v34 = vsel %vm33, %v32, %v30
  %35 = vrot.lane.b32.xlu0 %v34, 40
  %v36 = vpop.permute.xlu0 %35
  %vm37 = vcmask 392512
  %38 = vst.msk [vmem:[%s1] sm:$0x1f] %vm37, %v36
  %s39 = scalar_lea.vmem %s0, 4
  %v40 = vld [vmem:[%s39] ss:$8 sm:$0xf]
  %s41 = scalar_lea.vmem %s0, 32
  %v42 = vld [vmem:[%s41] sm:$0x10]
  %vm43 = vcmask 1044484
  %v44 = vsel %vm43, %v42, %v40
  %45 = vrot.lane.b32.xlu0 %v44, 32
  %v46 = vpop.permute.xlu0 %45
  %vm47 = vcmask 326912
  %48 = vst.msk [vmem:[%s1] sm:$0x1f] %vm47, %v46
  %s49 = scalar_lea.vmem %s0, 3
  %v50 = vld [vmem:[%s49] ss:$8 sm:$0xf]
  %s51 = scalar_lea.vmem %s0, 31
  %v52 = vld [vmem:[%s51] sm:$0x10]
  %vm53 = vcmask 1044484
  %v54 = vsel %vm53, %v52, %v50
  %55 = vrot.lane.b32.xlu0 %v54, 24
  %v56 = vpop.permute.xlu0 %55
  %vm57 = vcmask 261312
  %58 = vst.msk [vmem:[%s1] sm:$0x1f] %vm57, %v56
  %s59 = scalar_lea.vmem %s0, 2
  %v60 = vld [vmem:[%s59] ss:$8 sm:$0xf]
  %s61 = scalar_lea.vmem %s0, 30
  %v62 = vld [vmem:[%s61] sm:$0x10]
  %vm63 = vcmask 1044484
  %v64 = vsel %vm63, %v62, %v60
  %65 = vrot.lane.b32.xlu0 %v64, 16
  %v66 = vpop.permute.xlu0 %65
  %vm67 = vcmask 195712
  %68 = vst.msk [vmem:[%s1] sm:$0x1f] %vm67, %v66
  %s69 = scalar_lea.vmem %s0, 1
  %v70 = vld [vmem:[%s69] ss:$8 sm:$0xf]
  %s71 = scalar_lea.vmem %s0, 29
  %v72 = vld [vmem:[%s71] sm:$0x10]
  %vm73 = vcmask 1044484
  %v74 = vsel %vm73, %v72, %v70
  %75 = vrot.lane.b32.xlu0 %v74, 8
  %v76 = vpop.permute.xlu0 %75
  %vm77 = vcmask 130112
  %78 = vst.msk [vmem:[%s1] sm:$0x1f] %vm77, %v76

// kernel: sanet_forward.1
$region0: #{sanet_forward.1}
  #allocation0 [shape = 'u32[]', space=smem, size = 0x4, offset = 0x4, fixed_abs, tag = 'smem constant byte address 0x4 - core index']
  #allocation1 [shape = 'u32[72,128]{1,0:T(1,128)}', space=vmem, size = 0x9000, scoped, tag = 'internal scratch']
  #allocation2 [shape = 'f32[40,64]{1,0:T(8,128)}', space=vmem, size = 0x5000, scoped, tag = 'scratch operand']
  #allocation3 [shape = 'f32[64,128]{1,0:T(8,128)}', space=vmem, size = 0x8000, scoped, tag = 'scratch operand']
  #allocation4 [shape = 'f32[1]{0:T(128)S(6)}', space=smem, size = 0x200, scoped, tag = 'scoped memory for sanet_forward.1']
  %s0 = inlined_call_operand.vmem [shape: f32[2,8,64], index: 0, kind: input, shape index: {}]
  %s1 = inlined_call_operand.vmem [shape: f32[2,128,64], index: 1, kind: input, shape index: {}]
  %s2 = inlined_call_operand.vmem [shape: f32[64,64], index: 2, kind: input, shape index: {}]
  %s3 = inlined_call_operand.vmem [shape: f32[1,64], index: 3, kind: input, shape index: {}]
  %s4 = inlined_call_operand.vmem [shape: f32[64,64], index: 4, kind: input, shape index: {}]
  %s5 = inlined_call_operand.vmem [shape: f32[1,64], index: 5, kind: input, shape index: {}]
  %s6 = inlined_call_operand.vmem [shape: f32[5,64], index: 6, kind: input, shape index: {}]
  %s7 = inlined_call_operand.vmem [shape: f32[4,1,1], index: 7, kind: input, shape index: {}]
  %s8 = inlined_call_operand.vmem [shape: f32[4,1,1], index: 8, kind: input, shape index: {}]
  %s9 = inlined_call_operand.<no memory space> [shape: f32[1], index: 9, kind: input, shape index: {}]
  %s10 = inlined_call_operand.hbm [shape: f32[2,8,128], index: 10, kind: output, shape index: {0}]
  %s11 = inlined_call_operand.hbm [shape: f32[2,8,128], index: 11, kind: output, shape index: {1}]
  %12 = xla_tuple %s10, %s11
  %s13 = sld [smem:[#allocation0]]
  $region81: #{sanet_forward.1} parent=0
    _
  %s15 = ssub.s32 1, %s13
  %s16 = scalar_select 0, %s15, %s13
  %17 = sst [smem:[#allocation4]] %s9
  $region1: #{sanet_forward.1} parent=0
    #allocation5 [shape = 'u8[8192]{0}', space=vmem, size = 0x2000, scoped, tag = 'output window, operand 0']
    #allocation6 [shape = 's32[2]{0}', space=sflag, size = 0x8, scoped, tag = 'scoped memory for sanet_forward.1']
    #allocation7 [shape = 'u8[8192]{0}', space=vmem, size = 0x2000, scoped, tag = 'output window, operand 1']
    #allocation8 [shape = 's32[2]{0}', space=sflag, size = 0x8, scoped, tag = 'scoped memory for sanet_forward.1']
    %18 = vsyncpa [#allocation6], 0
    %s19 = scalar_lea.sflag [#allocation6], 1
    %20 = vsyncpa %s19, 0
    %21 = vsyncpa [#allocation8], 0
    %s22 = scalar_lea.sflag [#allocation8], 1
    %23 = vsyncpa %s22, 0
    loop: start=0, step=1, limit=4
    $region2: #{sanet_forward.1} parent=1 // loop_pre_header
      _
    $region3: #{sanet_forward.1} parent=1 // loop_header
      %s25 = sphi 0, %s29
      %p26 = scmp.ge.s32.totalorder %s25, 4
      %s35 = sphi 0, %s37
      %s38 = sphi 0, %s35
      %s39 = sphi 0, %s38
      %s55 = sphi 0, %s39
      %s61 = sphi 0, %s63
      %s64 = sphi 0, %s61
      %s65 = sphi 0, %s64
      %s81 = sphi 0, %s65
      %s85 = sphi 0, %s85
      %s87 = sphi 0, %s85
      %s88 = sphi 0, %s87
      %s102 = sphi 0, %s88
      %s106 = sphi 0, %s106
      %s108 = sphi 0, %s106
      %s109 = sphi 0, %s108
      %s123 = sphi 0, %s109
      %s127 = sphi 0, %s127
      %s129 = sphi 0, %s127
      %s130 = sphi 0, %s129
      %s144 = sphi 0, %s130
      %s148 = sphi 0, %s148
      %s150 = sphi 0, %s148
      %s151 = sphi 0, %s150
      %s165 = sphi 0, %s151
      %s169 = sphi 0, %s169
      %s171 = sphi 0, %s169
      %s172 = sphi 0, %s171
      %s186 = sphi 0, %s172
      %s190 = sphi 0, %s190
      %s192 = sphi 0, %s190
      %s193 = sphi 0, %s192
      %s207 = sphi 0, %s193
      %s211 = sphi 0, %s211
      %s213 = sphi 0, %s211
      %s214 = sphi 0, %s213
      %s228 = sphi 0, %s214
      %s232 = sphi 0, %s232
      %s234 = sphi 0, %s232
      %s235 = sphi 0, %s234
      %s249 = sphi 0, %s235
      %s255 = sphi 0, %s257
      %s258 = sphi 0, %s255
      %s259 = sphi 0, %s258
      %s275 = sphi 0, %s259
      %s281 = sphi 0, %s283
      %s284 = sphi 0, %s281
      %s285 = sphi 0, %s284
      %s301 = sphi 0, %s285
    $region4: #{sanet_forward.1} parent=1 // loop_header_branch
      %28 = sbr.rel (%p26) target = $region8
    $region5: #{sanet_forward.1} parent=1 // loop_body
      %s30 = ssub.s32 %s25, 1
      %s31 = ssub.s32 %s25, 2
      %s32 = sadd.s32 %s25, 1
      %s33 = ssub.s32 %s25, %s32
      %p34 = scmp.eq.s32.totalorder %s33, 0
      %s36 = sadd.s32 %s35, 1
      %s37 = scalar_select %p34, %s35, %s36
      %p40 = pneg %p34
      %p41 = scmp.eq.s32.totalorder %s25, 1
      %p42 = por %p40, %p41
      %p43 = scmp.ne.s32.totalorder %s35, %s38
      %p44 = scmp.eq.s32.totalorder %s25, 0
      %p45 = por %p43, %p44
      %p46 = scmp.ne.s32.totalorder %s35, %s38
      %p47 = scmp.eq.s32.totalorder %s30, 1
      %p48 = por %p46, %p47
      %p49 = scmp.ne.s32.totalorder %s38, %s39
      %p50 = scmp.eq.s32.totalorder %s30, 0
      %p51 = por %p49, %p50
      %p52 = scmp.ne.s32.totalorder %s38, %s39
      %p53 = scmp.eq.s32.totalorder %s31, 1
      %p54 = por %p52, %p53
      %p56 = scmp.ne.s32.totalorder %s39, %s55
      %p57 = scmp.eq.s32.totalorder %s31, 0
      %p58 = por %p56, %p57
      %s59 = ssub.s32 %s25, %s32
      %p60 = scmp.eq.s32.totalorder %s59, 0
      %s62 = sadd.s32 %s61, 1
      %s63 = scalar_select %p60, %s61, %s62
      %p66 = pneg %p60
      %p67 = scmp.eq.s32.totalorder %s25, 1
      %p68 = por %p66, %p67
      %p69 = scmp.ne.s32.totalorder %s61, %s64
      %p70 = scmp.eq.s32.totalorder %s25, 0
      %p71 = por %p69, %p70
      %p72 = scmp.ne.s32.totalorder %s61, %s64
      %p73 = scmp.eq.s32.totalorder %s30, 1
      %p74 = por %p72, %p73
      %p75 = scmp.ne.s32.totalorder %s64, %s65
      %p76 = scmp.eq.s32.totalorder %s30, 0
      %p77 = por %p75, %p76
      %p78 = scmp.ne.s32.totalorder %s64, %s65
      %p79 = scmp.eq.s32.totalorder %s31, 1
      %p80 = por %p78, %p79
      %p82 = scmp.ne.s32.totalorder %s65, %s81
      %p83 = scmp.eq.s32.totalorder %s31, 0
      %p84 = por %p82, %p83
      %s86 = sadd.s32 %s85, 1
      %p89 = scmp.eq.s32.totalorder %s25, 1
      %p90 = scmp.ne.s32.totalorder %s85, %s87
      %p91 = scmp.eq.s32.totalorder %s25, 0
      %p92 = por %p90, %p91
      %p93 = scmp.ne.s32.totalorder %s85, %s87
      %p94 = scmp.eq.s32.totalorder %s30, 1
      %p95 = por %p93, %p94
      %p96 = scmp.ne.s32.totalorder %s87, %s88
      %p97 = scmp.eq.s32.totalorder %s30, 0
      %p98 = por %p96, %p97
      %p99 = scmp.ne.s32.totalorder %s87, %s88
      %p100 = scmp.eq.s32.totalorder %s31, 1
      %p101 = por %p99, %p100
      %p103 = scmp.ne.s32.totalorder %s88, %s102
      %p104 = scmp.eq.s32.totalorder %s31, 0
      %p105 = por %p103, %p104
      %s107 = sadd.s32 %s106, 1
      %p110 = scmp.eq.s32.totalorder %s25, 1
      %p111 = scmp.ne.s32.totalorder %s106, %s108
      %p112 = scmp.eq.s32.totalorder %s25, 0
      %p113 = por %p111, %p112
      %p114 = scmp.ne.s32.totalorder %s106, %s108
      %p115 = scmp.eq.s32.totalorder %s30, 1
      %p116 = por %p114, %p115
      %p117 = scmp.ne.s32.totalorder %s108, %s109
      %p118 = scmp.eq.s32.totalorder %s30, 0
      %p119 = por %p117, %p118
      %p120 = scmp.ne.s32.totalorder %s108, %s109
      %p121 = scmp.eq.s32.totalorder %s31, 1
      %p122 = por %p120, %p121
      %p124 = scmp.ne.s32.totalorder %s109, %s123
      %p125 = scmp.eq.s32.totalorder %s31, 0
      %p126 = por %p124, %p125
      %s128 = sadd.s32 %s127, 1
      %p131 = scmp.eq.s32.totalorder %s25, 1
      %p132 = scmp.ne.s32.totalorder %s127, %s129
      %p133 = scmp.eq.s32.totalorder %s25, 0
      %p134 = por %p132, %p133
      %p135 = scmp.ne.s32.totalorder %s127, %s129
      %p136 = scmp.eq.s32.totalorder %s30, 1
      %p137 = por %p135, %p136
      %p138 = scmp.ne.s32.totalorder %s129, %s130
      %p139 = scmp.eq.s32.totalorder %s30, 0
      %p140 = por %p138, %p139
      %p141 = scmp.ne.s32.totalorder %s129, %s130
      %p142 = scmp.eq.s32.totalorder %s31, 1
      %p143 = por %p141, %p142
      %p145 = scmp.ne.s32.totalorder %s130, %s144
      %p146 = scmp.eq.s32.totalorder %s31, 0
      %p147 = por %p145, %p146
      %s149 = sadd.s32 %s148, 1
      %p152 = scmp.eq.s32.totalorder %s25, 1
      %p153 = scmp.ne.s32.totalorder %s148, %s150
      %p154 = scmp.eq.s32.totalorder %s25, 0
      %p155 = por %p153, %p154
      %p156 = scmp.ne.s32.totalorder %s148, %s150
      %p157 = scmp.eq.s32.totalorder %s30, 1
      %p158 = por %p156, %p157
      %p159 = scmp.ne.s32.totalorder %s150, %s151
      %p160 = scmp.eq.s32.totalorder %s30, 0
      %p161 = por %p159, %p160
      %p162 = scmp.ne.s32.totalorder %s150, %s151
      %p163 = scmp.eq.s32.totalorder %s31, 1
      %p164 = por %p162, %p163
      %p166 = scmp.ne.s32.totalorder %s151, %s165
      %p167 = scmp.eq.s32.totalorder %s31, 0
      %p168 = por %p166, %p167
      %s170 = sadd.s32 %s169, 1
      %p173 = scmp.eq.s32.totalorder %s25, 1
      %p174 = scmp.ne.s32.totalorder %s169, %s171
      %p175 = scmp.eq.s32.totalorder %s25, 0
      %p176 = por %p174, %p175
      %p177 = scmp.ne.s32.totalorder %s169, %s171
      %p178 = scmp.eq.s32.totalorder %s30, 1
      %p179 = por %p177, %p178
      %p180 = scmp.ne.s32.totalorder %s171, %s172
      %p181 = scmp.eq.s32.totalorder %s30, 0
      %p182 = por %p180, %p181
      %p183 = scmp.ne.s32.totalorder %s171, %s172
      %p184 = scmp.eq.s32.totalorder %s31, 1
      %p185 = por %p183, %p184
      %p187 = scmp.ne.s32.totalorder %s172, %s186
      %p188 = scmp.eq.s32.totalorder %s31, 0
      %p189 = por %p187, %p188
      %s191 = sadd.s32 %s190, 1
      %p194 = scmp.eq.s32.totalorder %s25, 1
      %p195 = scmp.ne.s32.totalorder %s190, %s192
      %p196 = scmp.eq.s32.totalorder %s25, 0
      %p197 = por %p195, %p196
      %p198 = scmp.ne.s32.totalorder %s190, %s192
      %p199 = scmp.eq.s32.totalorder %s30, 1
      %p200 = por %p198, %p199
      %p201 = scmp.ne.s32.totalorder %s192, %s193
      %p202 = scmp.eq.s32.totalorder %s30, 0
      %p203 = por %p201, %p202
      %p204 = scmp.ne.s32.totalorder %s192, %s193
      %p205 = scmp.eq.s32.totalorder %s31, 1
      %p206 = por %p204, %p205
      %p208 = scmp.ne.s32.totalorder %s193, %s207
      %p209 = scmp.eq.s32.totalorder %s31, 0
      %p210 = por %p208, %p209
      %s212 = sadd.s32 %s211, 1
      %p215 = scmp.eq.s32.totalorder %s25, 1
      %p216 = scmp.ne.s32.totalorder %s211, %s213
      %p217 = scmp.eq.s32.totalorder %s25, 0
      %p218 = por %p216, %p217
      %p219 = scmp.ne.s32.totalorder %s211, %s213
      %p220 = scmp.eq.s32.totalorder %s30, 1
      %p221 = por %p219, %p220
      %p222 = scmp.ne.s32.totalorder %s213, %s214
      %p223 = scmp.eq.s32.totalorder %s30, 0
      %p224 = por %p222, %p223
      %p225 = scmp.ne.s32.totalorder %s213, %s214
      %p226 = scmp.eq.s32.totalorder %s31, 1
      %p227 = por %p225, %p226
      %p229 = scmp.ne.s32.totalorder %s214, %s228
      %p230 = scmp.eq.s32.totalorder %s31, 0
      %p231 = por %p229, %p230
      %s233 = sadd.s32 %s232, 1
      %p236 = scmp.eq.s32.totalorder %s25, 1
      %p237 = scmp.ne.s32.totalorder %s232, %s234
      %p238 = scmp.eq.s32.totalorder %s25, 0
      %p239 = por %p237, %p238
      %p240 = scmp.ne.s32.totalorder %s232, %s234
      %p241 = scmp.eq.s32.totalorder %s30, 1
      %p242 = por %p240, %p241
      %p243 = scmp.ne.s32.totalorder %s234, %s235
      %p244 = scmp.eq.s32.totalorder %s30, 0
      %p245 = por %p243, %p244
      %p246 = scmp.ne.s32.totalorder %s234, %s235
      %p247 = scmp.eq.s32.totalorder %s31, 1
      %p248 = por %p246, %p247
      %p250 = scmp.ne.s32.totalorder %s235, %s249
      %p251 = scmp.eq.s32.totalorder %s31, 0
      %p252 = por %p250, %p251
      %s253 = ssub.s32 %s25, %s32
      %p254 = scmp.eq.s32.totalorder %s253, 0
      %s256 = sadd.s32 %s255, 1
      %s257 = scalar_select %p254, %s255, %s256
      %p260 = pneg %p254
      %p261 = scmp.eq.s32.totalorder %s25, 1
      %p262 = por %p260, %p261
      %p263 = scmp.ne.s32.totalorder %s255, %s258
      %p264 = scmp.eq.s32.totalorder %s25, 0
      %p265 = por %p263, %p264
      %p266 = scmp.ne.s32.totalorder %s255, %s258
      %p267 = scmp.eq.s32.totalorder %s30, 1
      %p268 = por %p266, %p267
      %p269 = scmp.ne.s32.totalorder %s258, %s259
      %p270 = scmp.eq.s32.totalorder %s30, 0
      %p271 = por %p269, %p270
      %p272 = scmp.ne.s32.totalorder %s258, %s259
      %p273 = scmp.eq.s32.totalorder %s31, 1
      %p274 = por %p272, %p273
      %p276 = scmp.ne.s32.totalorder %s259, %s275
      %p277 = scmp.eq.s32.totalorder %s31, 0
      %p278 = por %p276, %p277
      %s279 = ssub.s32 %s25, %s32
      %p280 = scmp.eq.s32.totalorder %s279, 0
      %s282 = sadd.s32 %s281, 1
      %s283 = scalar_select %p280, %s281, %s282
      %p286 = pneg %p280
      %p287 = scmp.eq.s32.totalorder %s25, 1
      %p288 = por %p286, %p287
      %p289 = scmp.ne.s32.totalorder %s281, %s284
      %p290 = scmp.eq.s32.totalorder %s25, 0
      %p291 = por %p289, %p290
      %p292 = scmp.ne.s32.totalorder %s281, %s284
      %p293 = scmp.eq.s32.totalorder %s30, 1
      %p294 = por %p292, %p293
      %p295 = scmp.ne.s32.totalorder %s284, %s285
      %p296 = scmp.eq.s32.totalorder %s30, 0
      %p297 = por %p295, %p296
      %p298 = scmp.ne.s32.totalorder %s284, %s285
      %p299 = scmp.eq.s32.totalorder %s31, 1
      %p300 = por %p298, %p299
      %p302 = scmp.ne.s32.totalorder %s285, %s301
      %p303 = scmp.eq.s32.totalorder %s31, 0
      %p304 = por %p302, %p303
      %p305 = scmp.le.s32.totalorder 1, %s25
      %p306 = scmp.lt.s32.totalorder %s25, 3
      %p307 = pnand %p305, %p306
      %p308 = pneg %p307
      // Predicated region
      $region9: #{sanet_forward.1} parent=5 // pred_check
        _
      $region10: #{sanet_forward.1} parent=5 // pred_check_branch
        %310 = sbr.rel (%p307) target = $region12
      $region11: #{sanet_forward.1} parent=5 // pred_region
        %s311 = ssub.s32 %s25, 1
        // Predicated region
        $region13: #{sanet_forward.1} parent=11 // pred_check
          %p312 = pneg %p98
        $region14: #{sanet_forward.1} parent=11 // pred_check_branch
          %314 = sbr.rel (%p312) target = $region16
        $region15: #{sanet_forward.1} parent=11 // pred_region
          _
        $region16: #{sanet_forward.1} parent=11 // pred_fallthru
          _
        // Predicated region
        $region17: #{sanet_forward.1} parent=11 // pred_check
          %p315 = pneg %p119
        $region18: #{sanet_forward.1} parent=11 // pred_check_branch
          %317 = sbr.rel (%p315) target = $region20
        $region19: #{sanet_forward.1} parent=11 // pred_region
          _
        $region20: #{sanet_forward.1} parent=11 // pred_fallthru
          _
        // Predicated region
        $region21: #{sanet_forward.1} parent=11 // pred_check
          %p318 = pneg %p140
        $region22: #{sanet_forward.1} parent=11 // pred_check_branch
          %320 = sbr.rel (%p318) target = $region24
        $region23: #{sanet_forward.1} parent=11 // pred_region
          _
        $region24: #{sanet_forward.1} parent=11 // pred_fallthru
          _
        // Predicated region
        $region25: #{sanet_forward.1} parent=11 // pred_check
          %p321 = pneg %p161
        $region26: #{sanet_forward.1} parent=11 // pred_check_branch
          %323 = sbr.rel (%p321) target = $region28
        $region27: #{sanet_forward.1} parent=11 // pred_region
          _
        $region28: #{sanet_forward.1} parent=11 // pred_fallthru
          _
        // Predicated region
        $region29: #{sanet_forward.1} parent=11 // pred_check
          %p324 = pneg %p182
        $region30: #{sanet_forward.1} parent=11 // pred_check_branch
          %326 = sbr.rel (%p324) target = $region32
        $region31: #{sanet_forward.1} parent=11 // pred_region
          _
        $region32: #{sanet_forward.1} parent=11 // pred_fallthru
          _
        // Predicated region
        $region33: #{sanet_forward.1} parent=11 // pred_check
          %p327 = pneg %p203
        $region34: #{sanet_forward.1} parent=11 // pred_check_branch
          %329 = sbr.rel (%p327) target = $region36
        $region35: #{sanet_forward.1} parent=11 // pred_region
          _
        $region36: #{sanet_forward.1} parent=11 // pred_fallthru
          _
        // Predicated region
        $region37: #{sanet_forward.1} parent=11 // pred_check
          %p330 = pneg %p224
        $region38: #{sanet_forward.1} parent=11 // pred_check_branch
          %332 = sbr.rel (%p330) target = $region40
        $region39: #{sanet_forward.1} parent=11 // pred_region
          _
        $region40: #{sanet_forward.1} parent=11 // pred_fallthru
          _
        // Predicated region
        $region41: #{sanet_forward.1} parent=11 // pred_check
          %p333 = pneg %p245
        $region42: #{sanet_forward.1} parent=11 // pred_check_branch
          %335 = sbr.rel (%p333) target = $region44
        $region43: #{sanet_forward.1} parent=11 // pred_region
          _
        $region44: #{sanet_forward.1} parent=11 // pred_fallthru
          _
      $region12: #{sanet_forward.1} parent=5 // pred_fallthru
        _
      %p336 = scmp.lt.s32.totalorder %s25, 2
      // Predicated region
      $region45: #{sanet_forward.1} parent=5 // pred_check
        %p337 = pneg %p336
      $region46: #{sanet_forward.1} parent=5 // pred_check_branch
        %339 = sbr.rel (%p337) target = $region48
      $region47: #{sanet_forward.1} parent=5 // pred_region
        // Predicated region
        $region49: #{sanet_forward.1} parent=47 // pred_check
          %p340 = pneg %p45
        $region50: #{sanet_forward.1} parent=47 // pred_check_branch
          %342 = sbr.rel (%p340) target = $region52
        $region51: #{sanet_forward.1} parent=47 // pred_region
          %p343 = scmp.lt.s32.totalorder %s25, 1
          %s344 = scalar_select %p343, %s25, 1
          %s345 = smul.addr %s344, 8
          %s346 = scalar_lea.vmem %s0, %s345
        $region52: #{sanet_forward.1} parent=47 // pred_fallthru
          _
        // Predicated region
        $region53: #{sanet_forward.1} parent=47 // pred_check
          %p347 = pneg %p71
        $region54: #{sanet_forward.1} parent=47 // pred_check_branch
          %349 = sbr.rel (%p347) target = $region56
        $region55: #{sanet_forward.1} parent=47 // pred_region
          %p350 = scmp.lt.s32.totalorder %s25, 1
          %s351 = scalar_select %p350, %s25, 1
          %s352 = smul.addr %s351, 16
          %s353 = smul.addr %s352, 8
          %s354 = scalar_lea.vmem %s1, %s353
        $region56: #{sanet_forward.1} parent=47 // pred_fallthru
          _
      $region48: #{sanet_forward.1} parent=5 // pred_fallthru
        _
      %p355 = scmp.le.s32.totalorder 1, %s25
      %p356 = scmp.lt.s32.totalorder %s25, 3
      %p357 = pnand %p355, %p356
      %p358 = pneg %p357
      // Predicated region
      $region57: #{sanet_forward.1} parent=5 // pred_check
        _
      $region58: #{sanet_forward.1} parent=5 // pred_check_branch
        %360 = sbr.rel (%p357) target = $region60
      $region59: #{sanet_forward.1} parent=5 // pred_region
        %s361 = ssub.s32 %s25, 1
        %p362 = scmp.lt.s32.totalorder %s30, 1
        %s363 = scalar_select %p362, %s30, 1
        %s364 = smul.addr %s363, 8
        %s365 = scalar_lea.vmem %s0, %s364
        %p366 = pneg %p51
        %p367 = pneg %p48
        %p368 = scmp.lt.s32.totalorder %s30, 1
        %s369 = scalar_select %p368, %s30, 1
        %s370 = smul.addr %s369, 16
        %s371 = smul.addr %s370, 8
        %s372 = scalar_lea.vmem %s1, %s371
        %p373 = pneg %p77
        %p374 = pneg %p74
        %p375 = pneg %p98
        %p376 = pneg %p95
        %p377 = pneg %p119
        %p378 = pneg %p116
        %p379 = pneg %p140
        %p380 = pneg %p137
        %p381 = pneg %p161
        %p382 = pneg %p158
        %p383 = pneg %p182
        %p384 = pneg %p179
        %p385 = pneg %p203
        %p386 = pneg %p200
        %p387 = pneg %p224
        %p388 = pneg %p221
        %p389 = pneg %p245
        %p390 = pneg %p242
        %p391 = pneg %p271
        %p392 = pneg %p268
        %s393 = sand.u32 %s258, 1
        %s394 = scalar_lea.sflag [#allocation6], %s393
        %s395 = sand.u32 %s258, 1
        %s396 = smul.addr %s395, 8
        %s397 = scalar_lea.vmem [#allocation5], %s396
        %p398 = pneg %p297
        %p399 = pneg %p294
        %s400 = sand.u32 %s284, 1
        %s401 = scalar_lea.sflag [#allocation8], %s400
        %s402 = sand.u32 %s284, 1
        %s403 = smul.addr %s402, 8
        %s404 = scalar_lea.vmem [#allocation7], %s403
        %p405 = scmp.lt.s32.totalorder %s30, 1
        %s406 = scalar_select %p405, %s30, 1
        %s407 = smul.addr %s406, 8
        %s408 = scalar_lea.vmem %s0, %s407
        %p409 = scmp.lt.s32.totalorder %s30, 1
        %s410 = scalar_select %p409, %s30, 1
        %s411 = smul.addr %s410, 16
        %s412 = smul.addr %s411, 8
        %s413 = scalar_lea.vmem %s1, %s412
        %v414 = vld [vmem:[%s408] sm:$0xff]
        %v415 = vld [vmem:[%s2] sm:$0xff]
        %v416 = vld [vmem:[%s2 + $0x8] sm:$0xff]
        %v417 = vld [vmem:[%s2 + $0x10] sm:$0xff]
        %v418 = vld [vmem:[%s2 + $0x18] sm:$0xff]
        %v419 = vld [vmem:[%s2 + $0x20] sm:$0xff]
        %v420 = vld [vmem:[%s2 + $0x28] sm:$0xff]
        %v421 = vld [vmem:[%s2 + $0x30] sm:$0xff]
        %v422 = vld [vmem:[%s2 + $0x38] sm:$0xff]
        %v423 = vld [vmem:[%s3] sm:$0x1]
        %v425 = vperm.slane %v423, 0
        %vm427 = vcmask 523264
        %v429 = vsel %vm427, %v414, 0
        %431 = vmatpush.msra.mxu0 0.0
        %432 = vmatpush.msra.mxu0 0.0
        %433 = vmatpush.msra.mxu0 0.0
        %434 = vmatpush.msra.mxu0 0.0
        %435 = vmatpush.msra.mxu0 0.0
        %436 = vmatpush.msra.mxu0 0.0
        %437 = vmatpush.msra.mxu0 0.0
        %438 = vmatpush.msra.mxu0 0.0
        %439 = vmatpush.msra.mxu0 %v422
        %440 = vmatpush.msra.mxu0 %v421
        %441 = vmatpush.msra.mxu0 %v420
        %442 = vmatpush.msra.mxu0 %v419
        %443 = vmatpush.msra.mxu0 %v418
        %444 = vmatpush.msra.mxu0 %v417
        %445 = vmatpush.msra.mxu0 %v416
        %446 = vmatpush.msra.mxu0 %v415
        %447 = vmatmul.f32.gmra.mxu0 %v429
        %v448 = vpop.f32.mrf.mxu0
        %v449 = vadd.f32 %v425, %v448
        %450 = vdwg.mxu0
        %v451 = vld [vmem:[%s413] sm:$0xff]
        %v452 = vld [vmem:[%s413 + $0x8] sm:$0xff]
        %v453 = vld [vmem:[%s413 + $0x10] sm:$0xff]
        %v454 = vld [vmem:[%s413 + $0x18] sm:$0xff]
        %v455 = vld [vmem:[%s413 + $0x20] sm:$0xff]
        %v456 = vld [vmem:[%s413 + $0x28] sm:$0xff]
        %v457 = vld [vmem:[%s413 + $0x30] sm:$0xff]
        %v458 = vld [vmem:[%s413 + $0x38] sm:$0xff]
        %v459 = vld [vmem:[%s413 + $0x40] sm:$0xff]
        %v460 = vld [vmem:[%s413 + $0x48] sm:$0xff]
        %v461 = vld [vmem:[%s413 + $0x50] sm:$0xff]
        %v462 = vld [vmem:[%s413 + $0x58] sm:$0xff]
        %v463 = vld [vmem:[%s413 + $0x60] sm:$0xff]
        %v464 = vld [vmem:[%s413 + $0x68] sm:$0xff]
        %v465 = vld [vmem:[%s413 + $0x70] sm:$0xff]
        %v466 = vld [vmem:[%s413 + $0x78] sm:$0xff]
        %v467 = vld [vmem:[%s4] sm:$0xff]
        %v468 = vld [vmem:[%s4 + $0x8] sm:$0xff]
        %v469 = vld [vmem:[%s4 + $0x10] sm:$0xff]
        %v470 = vld [vmem:[%s4 + $0x18] sm:$0xff]
        %v471 = vld [vmem:[%s4 + $0x20] sm:$0xff]
        %v472 = vld [vmem:[%s4 + $0x28] sm:$0xff]
        %v473 = vld [vmem:[%s4 + $0x30] sm:$0xff]
        %v474 = vld [vmem:[%s4 + $0x38] sm:$0xff]
        %v475 = vld [vmem:[%s5] sm:$0x1]
        %v477 = vperm.slane %v475, 0
        %v480 = vsel %vm427, %v451, 0
        %v483 = vsel %vm427, %v452, 0
        %v486 = vsel %vm427, %v453, 0
        %v489 = vsel %vm427, %v454, 0
        %v492 = vsel %vm427, %v455, 0
        %v495 = vsel %vm427, %v456, 0
        %v498 = vsel %vm427, %v457, 0
        %v501 = vsel %vm427, %v458, 0
        %v504 = vsel %vm427, %v459, 0
        %v507 = vsel %vm427, %v460, 0
        %v510 = vsel %vm427, %v461, 0
        %v513 = vsel %vm427, %v462, 0
        %v516 = vsel %vm427, %v463, 0
        %v519 = vsel %vm427, %v464, 0
        %v522 = vsel %vm427, %v465, 0
        %v525 = vsel %vm427, %v466, 0
        %527 = vmatpush.msra.mxu0 0.0
        %528 = vmatpush.msra.mxu0 0.0
        %529 = vmatpush.msra.mxu0 0.0
        %530 = vmatpush.msra.mxu0 0.0
        %531 = vmatpush.msra.mxu0 0.0
        %532 = vmatpush.msra.mxu0 0.0
        %533 = vmatpush.msra.mxu0 0.0
        %534 = vmatpush.msra.mxu0 0.0
        %535 = vmatpush.msra.mxu0 %v474
        %536 = vmatpush.msra.mxu0 %v473
        %537 = vmatpush.msra.mxu0 %v472
        %538 = vmatpush.msra.mxu0 %v471
        %539 = vmatpush.msra.mxu0 %v470
        %540 = vmatpush.msra.mxu0 %v469
        %541 = vmatpush.msra.mxu0 %v468
        %542 = vmatpush.msra.mxu0 %v467
        %543 = vmatmul.f32.gmra.mxu0 %v480
        %v544 = vpop.f32.mrf.mxu0
        %v545 = vadd.f32 %v477, %v544
        %546 = vmatmul.f32.gmra.mxu0 %v483
        %v547 = vpop.f32.mrf.mxu0
        %v548 = vadd.f32 %v477, %v547
        %549 = vmatmul.f32.gmra.mxu0 %v486
        %v550 = vpop.f32.mrf.mxu0
        %v551 = vadd.f32 %v477, %v550
        %552 = vmatmul.f32.gmra.mxu0 %v489
        %v553 = vpop.f32.mrf.mxu0
        %v554 = vadd.f32 %v477, %v553
        %555 = vmatmul.f32.gmra.mxu0 %v492
        %v556 = vpop.f32.mrf.mxu0
        %v557 = vadd.f32 %v477, %v556
        %558 = vmatmul.f32.gmra.mxu0 %v495
        %v559 = vpop.f32.mrf.mxu0
        %v560 = vadd.f32 %v477, %v559
        %561 = vmatmul.f32.gmra.mxu0 %v498
        %v562 = vpop.f32.mrf.mxu0
        %v563 = vadd.f32 %v477, %v562
        %564 = vmatmul.f32.gmra.mxu0 %v501
        %v565 = vpop.f32.mrf.mxu0
        %v566 = vadd.f32 %v477, %v565
        %567 = vmatmul.f32.gmra.mxu0 %v504
        %v568 = vpop.f32.mrf.mxu0
        %v569 = vadd.f32 %v477, %v568
        %570 = vmatmul.f32.gmra.mxu0 %v507
        %v571 = vpop.f32.mrf.mxu0
        %v572 = vadd.f32 %v477, %v571
        %573 = vmatmul.f32.gmra.mxu0 %v510
        %v574 = vpop.f32.mrf.mxu0
        %v575 = vadd.f32 %v477, %v574
        %576 = vmatmul.f32.gmra.mxu0 %v513
        %v577 = vpop.f32.mrf.mxu0
        %v578 = vadd.f32 %v477, %v577
        %579 = vmatmul.f32.gmra.mxu0 %v516
        %v580 = vpop.f32.mrf.mxu0
        %v581 = vadd.f32 %v477, %v580
        %582 = vmatmul.f32.gmra.mxu0 %v519
        %v583 = vpop.f32.mrf.mxu0
        %v584 = vadd.f32 %v477, %v583
        %585 = vmatmul.f32.gmra.mxu0 %v522
        %v586 = vpop.f32.mrf.mxu0
        %v587 = vadd.f32 %v477, %v586
        %588 = vmatmul.f32.gmra.mxu0 %v525
        %v589 = vpop.f32.mrf.mxu0
        %v590 = vadd.f32 %v477, %v589
        %591 = vdwg.mxu0
        %592 = vxpose.xlu0.b32.start [1/16] %v545, 128
        %593 = vxpose.xlu0.b32.cont [2/16] %v548, 128
        %594 = vxpose.xlu0.b32.cont [3/16] %v551, 128
        %595 = vxpose.xlu0.b32.cont [4/16] %v554, 128
        %596 = vxpose.xlu0.b32.cont [5/16] %v557, 128
        %597 = vxpose.xlu0.b32.cont [6/16] %v560, 128
        %598 = vxpose.xlu0.b32.cont [7/16] %v563, 128
        %599 = vxpose.xlu0.b32.cont [8/16] %v566, 128
        %600 = vxpose.xlu0.b32.cont [9/16] %v569, 128
        %601 = vxpose.xlu0.b32.cont [10/16] %v572, 128
        %602 = vxpose.xlu0.b32.cont [11/16] %v575, 128
        %603 = vxpose.xlu0.b32.cont [12/16] %v578, 128
        %604 = vxpose.xlu0.b32.cont [13/16] %v581, 128
        %605 = vxpose.xlu0.b32.cont [14/16] %v584, 128
        %606 = vxpose.xlu0.b32.cont [15/16] %v587, 128
        %607 = vxpose.xlu0.b32.end [16/16] %v590, 128
        %v608 = vpop.trf.xlu0
        %v609 = vpop.trf.xlu0
        %v610 = vpop.trf.xlu0
        %v611 = vpop.trf.xlu0
        %v612 = vpop.trf.xlu0
        %v613 = vpop.trf.xlu0
        %v614 = vpop.trf.xlu0
        %v615 = vpop.trf.xlu0
        %v616 = vpop.trf.xlu0
        %v617 = vpop.trf.xlu0
        %v618 = vpop.trf.xlu0
        %v619 = vpop.trf.xlu0
        %v620 = vpop.trf.xlu0
        %v621 = vpop.trf.xlu0
        %v622 = vpop.trf.xlu0
        %v623 = vpop.trf.xlu0
        %624 = vst [vmem:[#allocation3] sm:$0xff] %v608
        %625 = vst [vmem:[#allocation3 + $0x8] sm:$0xff] %v609
        %626 = vst [vmem:[#allocation3 + $0x10] sm:$0xff] %v610
        %627 = vst [vmem:[#allocation3 + $0x18] sm:$0xff] %v611
        %628 = vst [vmem:[#allocation3 + $0x20] sm:$0xff] %v612
        %629 = vst [vmem:[#allocation3 + $0x28] sm:$0xff] %v613
        %630 = vst [vmem:[#allocation3 + $0x30] sm:$0xff] %v614
        %631 = vst [vmem:[#allocation3 + $0x38] sm:$0xff] %v615
        %v632 = vld [vmem:[%s6] sm:$0x1f]
        %v634 = vrot.slane %v632, 1
        %v635 = vrot.slane %v632, 2
        %v636 = vrot.slane %v632, 3
        %v637 = vrot.slane %v632, 4
        %v638 = vperm.slane %v632, 0
        %v639 = vperm.slane %v634, 0
        %v640 = vperm.slane %v635, 0
        %v641 = vperm.slane %v636, 0
        %v642 = vperm.slane %v637, 0
        %v648 = vmul.f32 %v449, %v638
        %v649 = vmul.f32 %v449, %v639
        %v650 = vmul.f32 %v449, %v640
        %v651 = vmul.f32 %v449, %v641
        %v652 = vmul.f32 %v449, %v642
        %653 = vst.msk [vmem:[#allocation2] sm:$0xff] %vm427, %v648
        %654 = vst.msk [vmem:[#allocation2 + $0x8] sm:$0xff] %vm427, %v649
        %655 = vst.msk [vmem:[#allocation2 + $0x10] sm:$0xff] %vm427, %v650
        %656 = vst.msk [vmem:[#allocation2 + $0x18] sm:$0xff] %vm427, %v651
        %657 = vst.msk [vmem:[#allocation2 + $0x20] sm:$0xff] %vm427, %v652
        %v658 = vld [vmem:[%s7] sm:$0x1]
        %v659 = vld [vmem:[%s7 + $0x1] sm:$0x1]
        %v660 = vld [vmem:[%s7 + $0x2] sm:$0x1]
        %v661 = vld [vmem:[%s7 + $0x3] sm:$0x1]
        %v662 = vld [vmem:[%s8] sm:$0x1]
        %v663 = vld [vmem:[%s8 + $0x1] sm:$0x1]
        %v664 = vld [vmem:[%s8 + $0x2] sm:$0x1]
        %v665 = vld [vmem:[%s8 + $0x3] sm:$0x1]
        %s666 = sld [smem:[#allocation4]]
        %v667 = vlaneseq
        %v668 = vand.u32 %v667, 127
        %vm669 = vcmp.lt.s32.totalorder %v668, 8
        %v670 = vsel %vm669, 1, 0
        %v671 = vcvt.s32.f32 %v670
        %v672 = vld [vmem:[#allocation2] sm:$0xff]
        %v673 = vld [vmem:[#allocation2 + $0x8] sm:$0xff]
        %v674 = vld [vmem:[#allocation2 + $0x10] sm:$0xff]
        %v675 = vld [vmem:[#allocation2 + $0x18] sm:$0xff]
        %v676 = vld [vmem:[#allocation2 + $0x20] sm:$0xff]
        %v677 = vld [vmem:[#allocation3] sm:$0xff]
        %vm678 = vcmask 64512
        %v680 = vsel %vm678, %v672, 0
        %v683 = vsel %vm678, %v673, 0
        %v686 = vsel %vm678, %v674, 0
        %v689 = vsel %vm678, %v675, 0
        %v692 = vsel %vm678, %v676, 0
        %694 = vmatpush.msra.mxu0 0.0
        %695 = vmatpush.msra.mxu0 0.0
        %696 = vmatpush.msra.mxu0 0.0
        %697 = vmatpush.msra.mxu0 0.0
        %698 = vmatpush.msra.mxu0 0.0
        %699 = vmatpush.msra.mxu0 0.0
        %700 = vmatpush.msra.mxu0 0.0
        %701 = vmatpush.msra.mxu0 0.0
        %702 = vmatpush.msra.mxu0 0.0
        %703 = vmatpush.msra.mxu0 0.0
        %704 = vmatpush.msra.mxu0 0.0
        %705 = vmatpush.msra.mxu0 0.0
        %706 = vmatpush.msra.mxu0 0.0
        %707 = vmatpush.msra.mxu0 0.0
        %708 = vmatpush.msra.mxu0 0.0
        %709 = vmatpush.msra.mxu0 %v677
        %710 = vmatmul.f32.gmra.mxu0 %v680
        %v711 = vpop.f32.mrf.mxu0
        %v712 = vadd.f32 0.0, %v711
        %713 = vmatmul.f32.gmra.mxu0 %v683
        %v714 = vpop.f32.mrf.mxu0
        %v715 = vadd.f32 0.0, %v714
        %716 = vmatmul.f32.gmra.mxu0 %v686
        %v717 = vpop.f32.mrf.mxu0
        %v718 = vadd.f32 0.0, %v717
        %719 = vmatmul.f32.gmra.mxu0 %v689
        %v720 = vpop.f32.mrf.mxu0
        %v721 = vadd.f32 0.0, %v720
        %722 = vmatmul.f32.gmra.mxu0 %v692
        %v723 = vpop.f32.mrf.mxu0
        %v724 = vadd.f32 0.0, %v723
        %725 = vdwg.mxu0
        %v730 = vperm.slane %v658, 0
        %v731 = vperm.slane %v659, 0
        %v732 = vperm.slane %v660, 0
        %v733 = vperm.slane %v661, 0
        %734 = vset.pattern.permute.xlu0 0
        %735 = vperm.xlu0 %734, %v730
        %v736 = vpop.permute.xlu0 %735
        %738 = vset.pattern.permute.xlu0 0
        %739 = vperm.xlu0 %738, %v731
        %v740 = vpop.permute.xlu0 %739
        %742 = vset.pattern.permute.xlu0 0
        %743 = vperm.xlu0 %742, %v732
        %v744 = vpop.permute.xlu0 %743
        %746 = vset.pattern.permute.xlu0 0
        %747 = vperm.xlu0 %746, %v733
        %v748 = vpop.permute.xlu0 %747
        %v750 = vadd.f32 %v712, %v736
        %v751 = vadd.f32 %v715, %v740
        %v752 = vadd.f32 %v718, %v744
        %v753 = vadd.f32 %v721, %v748
        %v754 = vmax.f32 %v750, 0.0
        %v755 = vmax.f32 %v751, 0.0
        %v756 = vmax.f32 %v752, 0.0
        %v757 = vmax.f32 %v753, 0.0
        %v762 = vperm.slane %v662, 0
        %v763 = vperm.slane %v663, 0
        %v764 = vperm.slane %v664, 0
        %v765 = vperm.slane %v665, 0
        %766 = vset.pattern.permute.xlu0 0
        %767 = vperm.xlu0 %766, %v762
        %v768 = vpop.permute.xlu0 %767
        %770 = vset.pattern.permute.xlu0 0
        %771 = vperm.xlu0 %770, %v763
        %v772 = vpop.permute.xlu0 %771
        %774 = vset.pattern.permute.xlu0 0
        %775 = vperm.xlu0 %774, %v764
        %v776 = vpop.permute.xlu0 %775
        %778 = vset.pattern.permute.xlu0 0
        %779 = vperm.xlu0 %778, %v765
        %v780 = vpop.permute.xlu0 %779
        %v782 = vmul.f32 %v754, %v768
        %v783 = vmul.f32 %v755, %v772
        %v784 = vmul.f32 %v756, %v776
        %v785 = vmul.f32 %v757, %v780
        %v786 = vadd.f32 %v782, %v783
        %v787 = vadd.f32 %v786, %v784
        %v788 = vadd.f32 %v787, %v785
        %v789 = vstv %s666
        %v790 = vadd.f32 %v788, %v789
        %vm791 = vcmp.gt.f32.partialorder %v790, 0.0
        %v792 = vsel %vm791, 1, 0
        %v793 = vcvt.s32.f32 %v792
        %v794 = vmul.f32 %v724, 0.35355338
        %v795 = vmul.f32 %v794, %v793
        %v796 = vmul.f32 %v795, %v671
        %v797 = vmul.f32 %v796, %v796
        %798 = vadd.xlane.f32.xlu0 %v797
        %v799 = vpop.xlane.xlu0 %798
        %v800 = vmax.f32 %v799, 1e-24
        %v801 = vrcp.pop %v800
        %v802 = vmul.f32 %v800, %v801
        %v803 = vsub.f32 1.0, %v802
        %v804 = vmul.f32 %v801, %v803
        %v805 = vadd.f32 %v801, %v804
        %vm806 = vweird.f32 %v800
        %vm807 = vweird.f32 %v801
        %vm808 = vmor %vm806, %vm807
        %v809 = vsel %vm808, %v801, %v805
        %v810 = vand.u32 2147483647, %v800
        %vm811 = vcmp.eq.f32.partialorder %v810, 8.507059e+37
        %v812 = vand.u32 %v800, 2147483648
        %v813 = vor.u32 1.1754944e-38, %v812
        %v814 = vsel %vm811, %v813, %v809
        %v815 = vadd.f32 %v793, 0.0
        %v816 = vmul.f32 %v797, %v814
        %v817 = vadd.f32 %v816, 0.0
        %v818 = vld [vmem:[#allocation3 + $0x8] sm:$0xff]
        %819 = vrot.lane.b32.xlu0 %v672, 120
        %v820 = vpop.permute.xlu0 %819
        %821 = vrot.lane.b32.xlu0 %v673, 120
        %v822 = vpop.permute.xlu0 %821
        %823 = vrot.lane.b32.xlu0 %v674, 120
        %v824 = vpop.permute.xlu0 %823
        %825 = vrot.lane.b32.xlu0 %v675, 120
        %v826 = vpop.permute.xlu0 %825
        %827 = vrot.lane.b32.xlu0 %v676, 120
        %v828 = vpop.permute.xlu0 %827
        %v829 = vsel %vm678, %v820, 0
        %v831 = vsel %vm678, %v822, 0
        %v833 = vsel %vm678, %v824, 0
        %v835 = vsel %vm678, %v826, 0
        %v837 = vsel %vm678, %v828, 0
        %839 = vmatpush.msra.mxu0 0.0
        %840 = vmatpush.msra.mxu0 0.0
        %841 = vmatpush.msra.mxu0 0.0
        %842 = vmatpush.msra.mxu0 0.0
        %843 = vmatpush.msra.mxu0 0.0
        %844 = vmatpush.msra.mxu0 0.0
        %845 = vmatpush.msra.mxu0 0.0
        %846 = vmatpush.msra.mxu0 0.0
        %847 = vmatpush.msra.mxu0 0.0
        %848 = vmatpush.msra.mxu0 0.0
        %849 = vmatpush.msra.mxu0 0.0
        %850 = vmatpush.msra.mxu0 0.0
        %851 = vmatpush.msra.mxu0 0.0
        %852 = vmatpush.msra.mxu0 0.0
        %853 = vmatpush.msra.mxu0 0.0
        %854 = vmatpush.msra.mxu0 %v818
        %855 = vmatmul.f32.gmra.mxu0 %v829
        %v856 = vpop.f32.mrf.mxu0
        %v857 = vadd.f32 0.0, %v856
        %858 = vmatmul.f32.gmra.mxu0 %v831
        %v859 = vpop.f32.mrf.mxu0
        %v860 = vadd.f32 0.0, %v859
        %861 = vmatmul.f32.gmra.mxu0 %v833
        %v862 = vpop.f32.mrf.mxu0
        %v863 = vadd.f32 0.0, %v862
        %864 = vmatmul.f32.gmra.mxu0 %v835
        %v865 = vpop.f32.mrf.mxu0
        %v866 = vadd.f32 0.0, %v865
        %867 = vmatmul.f32.gmra.mxu0 %v837
        %v868 = vpop.f32.mrf.mxu0
        %v869 = vadd.f32 0.0, %v868
        %870 = vdwg.mxu0
        %v871 = vadd.f32 %v857, %v736
        %v872 = vadd.f32 %v860, %v740
        %v873 = vadd.f32 %v863, %v744
        %v874 = vadd.f32 %v866, %v748
        %v875 = vmax.f32 %v871, 0.0
        %v876 = vmax.f32 %v872, 0.0
        %v877 = vmax.f32 %v873, 0.0
        %v878 = vmax.f32 %v874, 0.0
        %v879 = vmul.f32 %v875, %v768
        %v880 = vmul.f32 %v876, %v772
        %v881 = vmul.f32 %v877, %v776
        %v882 = vmul.f32 %v878, %v780
        %v883 = vadd.f32 %v879, %v880
        %v884 = vadd.f32 %v883, %v881
        %v885 = vadd.f32 %v884, %v882
        %v886 = vadd.f32 %v885, %v789
        %vm887 = vcmp.gt.f32.partialorder %v886, 0.0
        %v888 = vsel %vm887, 1, 0
        %v889 = vcvt.s32.f32 %v888
        %v890 = vmul.f32 %v869, 0.35355338
        %v891 = vmul.f32 %v890, %v889
        %v892 = vmul.f32 %v891, %v671
        %v893 = vmul.f32 %v892, %v892
        %894 = vadd.xlane.f32.xlu0 %v893
        %v895 = vpop.xlane.xlu0 %894
        %v896 = vmax.f32 %v895, 1e-24
        %v897 = vrcp.pop %v896
        %v898 = vmul.f32 %v896, %v897
        %v899 = vsub.f32 1.0, %v898
        %v900 = vmul.f32 %v897, %v899
        %v901 = vadd.f32 %v897, %v900
        %vm902 = vweird.f32 %v896
        %vm903 = vweird.f32 %v897
        %vm904 = vmor %vm902, %vm903
        %v905 = vsel %vm904, %v897, %v901
        %v906 = vand.u32 2147483647, %v896
        %vm907 = vcmp.eq.f32.partialorder %v906, 8.507059e+37
        %v908 = vand.u32 %v896, 2147483648
        %v909 = vor.u32 1.1754944e-38, %v908
        %v910 = vsel %vm907, %v909, %v905
        %v911 = vadd.f32 %v815, %v889
        %v912 = vmul.f32 %v893, %v910
        %v913 = vadd.f32 %v817, %v912
        %v914 = vld [vmem:[#allocation3 + $0x10] sm:$0xff]
        %915 = vrot.lane.b32.xlu0 %v672, 112
        %v916 = vpop.permute.xlu0 %915
        %917 = vrot.lane.b32.xlu0 %v673, 112
        %v918 = vpop.permute.xlu0 %917
        %919 = vrot.lane.b32.xlu0 %v674, 112
        %v920 = vpop.permute.xlu0 %919
        %921 = vrot.lane.b32.xlu0 %v675, 112
        %v922 = vpop.permute.xlu0 %921
        %923 = vrot.lane.b32.xlu0 %v676, 112
        %v924 = vpop.permute.xlu0 %923
        %v925 = vsel %vm678, %v916, 0
        %v927 = vsel %vm678, %v918, 0
        %v929 = vsel %vm678, %v920, 0
        %v931 = vsel %vm678, %v922, 0
        %v933 = vsel %vm678, %v924, 0
        %935 = vmatpush.msra.mxu0 0.0
        %936 = vmatpush.msra.mxu0 0.0
        %937 = vmatpush.msra.mxu0 0.0
        %938 = vmatpush.msra.mxu0 0.0
        %939 = vmatpush.msra.mxu0 0.0
        %940 = vmatpush.msra.mxu0 0.0
        %941 = vmatpush.msra.mxu0 0.0
        %942 = vmatpush.msra.mxu0 0.0
        %943 = vmatpush.msra.mxu0 0.0
        %944 = vmatpush.msra.mxu0 0.0
        %945 = vmatpush.msra.mxu0 0.0
        %946 = vmatpush.msra.mxu0 0.0
        %947 = vmatpush.msra.mxu0 0.0
        %948 = vmatpush.msra.mxu0 0.0
        %949 = vmatpush.msra.mxu0 0.0
        %950 = vmatpush.msra.mxu0 %v914
        %951 = vmatmul.f32.gmra.mxu0 %v925
        %v952 = vpop.f32.mrf.mxu0
        %v953 = vadd.f32 0.0, %v952
        %954 = vmatmul.f32.gmra.mxu0 %v927
        %v955 = vpop.f32.mrf.mxu0
        %v956 = vadd.f32 0.0, %v955
        %957 = vmatmul.f32.gmra.mxu0 %v929
        %v958 = vpop.f32.mrf.mxu0
        %v959 = vadd.f32 0.0, %v958
        %960 = vmatmul.f32.gmra.mxu0 %v931
        %v961 = vpop.f32.mrf.mxu0
        %v962 = vadd.f32 0.0, %v961
        %963 = vmatmul.f32.gmra.mxu0 %v933
        %v964 = vpop.f32.mrf.mxu0
        %v965 = vadd.f32 0.0, %v964
        %966 = vdwg.mxu0
        %v967 = vadd.f32 %v953, %v736
        %v968 = vadd.f32 %v956, %v740
        %v969 = vadd.f32 %v959, %v744
        %v970 = vadd.f32 %v962, %v748
        %v971 = vmax.f32 %v967, 0.0
        %v972 = vmax.f32 %v968, 0.0
        %v973 = vmax.f32 %v969, 0.0
        %v974 = vmax.f32 %v970, 0.0
        %v975 = vmul.f32 %v971, %v768
        %v976 = vmul.f32 %v972, %v772
        %v977 = vmul.f32 %v973, %v776
        %v978 = vmul.f32 %v974, %v780
        %v979 = vadd.f32 %v975, %v976
        %v980 = vadd.f32 %v979, %v977
        %v981 = vadd.f32 %v980, %v978
        %v982 = vadd.f32 %v981, %v789
        %vm983 = vcmp.gt.f32.partialorder %v982, 0.0
        %v984 = vsel %vm983, 1, 0
        %v985 = vcvt.s32.f32 %v984
        %v986 = vmul.f32 %v965, 0.35355338
        %v987 = vmul.f32 %v986, %v985
        %v988 = vmul.f32 %v987, %v671
        %v989 = vmul.f32 %v988, %v988
        %990 = vadd.xlane.f32.xlu0 %v989
        %v991 = vpop.xlane.xlu0 %990
        %v992 = vmax.f32 %v991, 1e-24
        %v993 = vrcp.pop %v992
        %v994 = vmul.f32 %v992, %v993
        %v995 = vsub.f32 1.0, %v994
        %v996 = vmul.f32 %v993, %v995
        %v997 = vadd.f32 %v993, %v996
        %vm998 = vweird.f32 %v992
        %vm999 = vweird.f32 %v993
        %vm1000 = vmor %vm998, %vm999
        %v1001 = vsel %vm1000, %v993, %v997
        %v1002 = vand.u32 2147483647, %v992
        %vm1003 = vcmp.eq.f32.partialorder %v1002, 8.507059e+37
        %v1004 = vand.u32 %v992, 2147483648
        %v1005 = vor.u32 1.1754944e-38, %v1004
        %v1006 = vsel %vm1003, %v1005, %v1001
        %v1007 = vadd.f32 %v911, %v985
        %v1008 = vmul.f32 %v989, %v1006
        %v1009 = vadd.f32 %v913, %v1008
        %v1010 = vld [vmem:[#allocation3 + $0x18] sm:$0xff]
        %1011 = vrot.lane.b32.xlu0 %v672, 104
        %v1012 = vpop.permute.xlu0 %1011
        %1013 = vrot.lane.b32.xlu0 %v673, 104
        %v1014 = vpop.permute.xlu0 %1013
        %1015 = vrot.lane.b32.xlu0 %v674, 104
        %v1016 = vpop.permute.xlu0 %1015
        %1017 = vrot.lane.b32.xlu0 %v675, 104
        %v1018 = vpop.permute.xlu0 %1017
        %1019 = vrot.lane.b32.xlu0 %v676, 104
        %v1020 = vpop.permute.xlu0 %1019
        %v1021 = vsel %vm678, %v1012, 0
        %v1023 = vsel %vm678, %v1014, 0
        %v1025 = vsel %vm678, %v1016, 0
        %v1027 = vsel %vm678, %v1018, 0
        %v1029 = vsel %vm678, %v1020, 0
        %1031 = vmatpush.msra.mxu0 0.0
        %1032 = vmatpush.msra.mxu0 0.0
        %1033 = vmatpush.msra.mxu0 0.0
        %1034 = vmatpush.msra.mxu0 0.0
        %1035 = vmatpush.msra.mxu0 0.0
        %1036 = vmatpush.msra.mxu0 0.0
        %1037 = vmatpush.msra.mxu0 0.0
        %1038 = vmatpush.msra.mxu0 0.0
        %1039 = vmatpush.msra.mxu0 0.0
        %1040 = vmatpush.msra.mxu0 0.0
        %1041 = vmatpush.msra.mxu0 0.0
        %1042 = vmatpush.msra.mxu0 0.0
        %1043 = vmatpush.msra.mxu0 0.0
        %1044 = vmatpush.msra.mxu0 0.0
        %1045 = vmatpush.msra.mxu0 0.0
        %1046 = vmatpush.msra.mxu0 %v1010
        %1047 = vmatmul.f32.gmra.mxu0 %v1021
        %v1048 = vpop.f32.mrf.mxu0
        %v1049 = vadd.f32 0.0, %v1048
        %1050 = vmatmul.f32.gmra.mxu0 %v1023
        %v1051 = vpop.f32.mrf.mxu0
        %v1052 = vadd.f32 0.0, %v1051
        %1053 = vmatmul.f32.gmra.mxu0 %v1025
        %v1054 = vpop.f32.mrf.mxu0
        %v1055 = vadd.f32 0.0, %v1054
        %1056 = vmatmul.f32.gmra.mxu0 %v1027
        %v1057 = vpop.f32.mrf.mxu0
        %v1058 = vadd.f32 0.0, %v1057
        %1059 = vmatmul.f32.gmra.mxu0 %v1029
        %v1060 = vpop.f32.mrf.mxu0
        %v1061 = vadd.f32 0.0, %v1060
        %1062 = vdwg.mxu0
        %v1063 = vadd.f32 %v1049, %v736
        %v1064 = vadd.f32 %v1052, %v740
        %v1065 = vadd.f32 %v1055, %v744
        %v1066 = vadd.f32 %v1058, %v748
        %v1067 = vmax.f32 %v1063, 0.0
        %v1068 = vmax.f32 %v1064, 0.0
        %v1069 = vmax.f32 %v1065, 0.0
        %v1070 = vmax.f32 %v1066, 0.0
        %v1071 = vmul.f32 %v1067, %v768
        %v1072 = vmul.f32 %v1068, %v772
        %v1073 = vmul.f32 %v1069, %v776
        %v1074 = vmul.f32 %v1070, %v780
        %v1075 = vadd.f32 %v1071, %v1072
        %v1076 = vadd.f32 %v1075, %v1073
        %v1077 = vadd.f32 %v1076, %v1074
        %v1078 = vadd.f32 %v1077, %v789
        %vm1079 = vcmp.gt.f32.partialorder %v1078, 0.0
        %v1080 = vsel %vm1079, 1, 0
        %v1081 = vcvt.s32.f32 %v1080
        %v1082 = vmul.f32 %v1061, 0.35355338
        %v1083 = vmul.f32 %v1082, %v1081
        %v1084 = vmul.f32 %v1083, %v671
        %v1085 = vmul.f32 %v1084, %v1084
        %1086 = vadd.xlane.f32.xlu0 %v1085
        %v1087 = vpop.xlane.xlu0 %1086
        %v1088 = vmax.f32 %v1087, 1e-24
        %v1089 = vrcp.pop %v1088
        %v1090 = vmul.f32 %v1088, %v1089
        %v1091 = vsub.f32 1.0, %v1090
        %v1092 = vmul.f32 %v1089, %v1091
        %v1093 = vadd.f32 %v1089, %v1092
        %vm1094 = vweird.f32 %v1088
        %vm1095 = vweird.f32 %v1089
        %vm1096 = vmor %vm1094, %vm1095
        %v1097 = vsel %vm1096, %v1089, %v1093
        %v1098 = vand.u32 2147483647, %v1088
        %vm1099 = vcmp.eq.f32.partialorder %v1098, 8.507059e+37
        %v1100 = vand.u32 %v1088, 2147483648
        %v1101 = vor.u32 1.1754944e-38, %v1100
        %v1102 = vsel %vm1099, %v1101, %v1097
        %v1103 = vadd.f32 %v1007, %v1081
        %v1104 = vmul.f32 %v1085, %v1102
        %v1105 = vadd.f32 %v1009, %v1104
        %v1106 = vld [vmem:[#allocation3 + $0x20] sm:$0xff]
        %1107 = vrot.lane.b32.xlu0 %v672, 96
        %v1108 = vpop.permute.xlu0 %1107
        %1109 = vrot.lane.b32.xlu0 %v673, 96
        %v1110 = vpop.permute.xlu0 %1109
        %1111 = vrot.lane.b32.xlu0 %v674, 96
        %v1112 = vpop.permute.xlu0 %1111
        %1113 = vrot.lane.b32.xlu0 %v675, 96
        %v1114 = vpop.permute.xlu0 %1113
        %1115 = vrot.lane.b32.xlu0 %v676, 96
        %v1116 = vpop.permute.xlu0 %1115
        %v1117 = vsel %vm678, %v1108, 0
        %v1119 = vsel %vm678, %v1110, 0
        %v1121 = vsel %vm678, %v1112, 0
        %v1123 = vsel %vm678, %v1114, 0
        %v1125 = vsel %vm678, %v1116, 0
        %1127 = vmatpush.msra.mxu0 0.0
        %1128 = vmatpush.msra.mxu0 0.0
        %1129 = vmatpush.msra.mxu0 0.0
        %1130 = vmatpush.msra.mxu0 0.0
        %1131 = vmatpush.msra.mxu0 0.0
        %1132 = vmatpush.msra.mxu0 0.0
        %1133 = vmatpush.msra.mxu0 0.0
        %1134 = vmatpush.msra.mxu0 0.0
        %1135 = vmatpush.msra.mxu0 0.0
        %1136 = vmatpush.msra.mxu0 0.0
        %1137 = vmatpush.msra.mxu0 0.0
        %1138 = vmatpush.msra.mxu0 0.0
        %1139 = vmatpush.msra.mxu0 0.0
        %1140 = vmatpush.msra.mxu0 0.0
        %1141 = vmatpush.msra.mxu0 0.0
        %1142 = vmatpush.msra.mxu0 %v1106
        %1143 = vmatmul.f32.gmra.mxu0 %v1117
        %v1144 = vpop.f32.mrf.mxu0
        %v1145 = vadd.f32 0.0, %v1144
        %1146 = vmatmul.f32.gmra.mxu0 %v1119
        %v1147 = vpop.f32.mrf.mxu0
        %v1148 = vadd.f32 0.0, %v1147
        %1149 = vmatmul.f32.gmra.mxu0 %v1121
        %v1150 = vpop.f32.mrf.mxu0
        %v1151 = vadd.f32 0.0, %v1150
        %1152 = vmatmul.f32.gmra.mxu0 %v1123
        %v1153 = vpop.f32.mrf.mxu0
        %v1154 = vadd.f32 0.0, %v1153
        %1155 = vmatmul.f32.gmra.mxu0 %v1125
        %v1156 = vpop.f32.mrf.mxu0
        %v1157 = vadd.f32 0.0, %v1156
        %1158 = vdwg.mxu0
        %v1159 = vadd.f32 %v1145, %v736
        %v1160 = vadd.f32 %v1148, %v740
        %v1161 = vadd.f32 %v1151, %v744
        %v1162 = vadd.f32 %v1154, %v748
        %v1163 = vmax.f32 %v1159, 0.0
        %v1164 = vmax.f32 %v1160, 0.0
        %v1165 = vmax.f32 %v1161, 0.0
        %v1166 = vmax.f32 %v1162, 0.0
        %v1167 = vmul.f32 %v1163, %v768
        %v1168 = vmul.f32 %v1164, %v772
        %v1169 = vmul.f32 %v1165, %v776
        %v1170 = vmul.f32 %v1166, %v780
        %v1171 = vadd.f32 %v1167, %v1168
        %v1172 = vadd.f32 %v1171, %v1169
        %v1173 = vadd.f32 %v1172, %v1170
        %v1174 = vadd.f32 %v1173, %v789
        %vm1175 = vcmp.gt.f32.partialorder %v1174, 0.0
        %v1176 = vsel %vm1175, 1, 0
        %v1177 = vcvt.s32.f32 %v1176
        %v1178 = vmul.f32 %v1157, 0.35355338
        %v1179 = vmul.f32 %v1178, %v1177
        %v1180 = vmul.f32 %v1179, %v671
        %v1181 = vmul.f32 %v1180, %v1180
        %1182 = vadd.xlane.f32.xlu0 %v1181
        %v1183 = vpop.xlane.xlu0 %1182
        %v1184 = vmax.f32 %v1183, 1e-24
        %v1185 = vrcp.pop %v1184
        %v1186 = vmul.f32 %v1184, %v1185
        %v1187 = vsub.f32 1.0, %v1186
        %v1188 = vmul.f32 %v1185, %v1187
        %v1189 = vadd.f32 %v1185, %v1188
        %vm1190 = vweird.f32 %v1184
        %vm1191 = vweird.f32 %v1185
        %vm1192 = vmor %vm1190, %vm1191
        %v1193 = vsel %vm1192, %v1185, %v1189
        %v1194 = vand.u32 2147483647, %v1184
        %vm1195 = vcmp.eq.f32.partialorder %v1194, 8.507059e+37
        %v1196 = vand.u32 %v1184, 2147483648
        %v1197 = vor.u32 1.1754944e-38, %v1196
        %v1198 = vsel %vm1195, %v1197, %v1193
        %v1199 = vadd.f32 %v1103, %v1177
        %v1200 = vmul.f32 %v1181, %v1198
        %v1201 = vadd.f32 %v1105, %v1200
        %v1202 = vld [vmem:[#allocation3 + $0x28] sm:$0xff]
        %1203 = vrot.lane.b32.xlu0 %v672, 88
        %v1204 = vpop.permute.xlu0 %1203
        %1205 = vrot.lane.b32.xlu0 %v673, 88
        %v1206 = vpop.permute.xlu0 %1205
        %1207 = vrot.lane.b32.xlu0 %v674, 88
        %v1208 = vpop.permute.xlu0 %1207
        %1209 = vrot.lane.b32.xlu0 %v675, 88
        %v1210 = vpop.permute.xlu0 %1209
        %1211 = vrot.lane.b32.xlu0 %v676, 88
        %v1212 = vpop.permute.xlu0 %1211
        %v1213 = vsel %vm678, %v1204, 0
        %v1215 = vsel %vm678, %v1206, 0
        %v1217 = vsel %vm678, %v1208, 0
        %v1219 = vsel %vm678, %v1210, 0
        %v1221 = vsel %vm678, %v1212, 0
        %1223 = vmatpush.msra.mxu0 0.0
        %1224 = vmatpush.msra.mxu0 0.0
        %1225 = vmatpush.msra.mxu0 0.0
        %1226 = vmatpush.msra.mxu0 0.0
        %1227 = vmatpush.msra.mxu0 0.0
        %1228 = vmatpush.msra.mxu0 0.0
        %1229 = vmatpush.msra.mxu0 0.0
        %1230 = vmatpush.msra.mxu0 0.0
        %1231 = vmatpush.msra.mxu0 0.0
        %1232 = vmatpush.msra.mxu0 0.0
        %1233 = vmatpush.msra.mxu0 0.0
        %1234 = vmatpush.msra.mxu0 0.0
        %1235 = vmatpush.msra.mxu0 0.0
        %1236 = vmatpush.msra.mxu0 0.0
        %1237 = vmatpush.msra.mxu0 0.0
        %1238 = vmatpush.msra.mxu0 %v1202
        %1239 = vmatmul.f32.gmra.mxu0 %v1213
        %v1240 = vpop.f32.mrf.mxu0
        %v1241 = vadd.f32 0.0, %v1240
        %1242 = vmatmul.f32.gmra.mxu0 %v1215
        %v1243 = vpop.f32.mrf.mxu0
        %v1244 = vadd.f32 0.0, %v1243
        %1245 = vmatmul.f32.gmra.mxu0 %v1217
        %v1246 = vpop.f32.mrf.mxu0
        %v1247 = vadd.f32 0.0, %v1246
        %1248 = vmatmul.f32.gmra.mxu0 %v1219
        %v1249 = vpop.f32.mrf.mxu0
        %v1250 = vadd.f32 0.0, %v1249
        %1251 = vmatmul.f32.gmra.mxu0 %v1221
        %v1252 = vpop.f32.mrf.mxu0
        %v1253 = vadd.f32 0.0, %v1252
        %1254 = vdwg.mxu0
        %v1255 = vadd.f32 %v1241, %v736
        %v1256 = vadd.f32 %v1244, %v740
        %v1257 = vadd.f32 %v1247, %v744
        %v1258 = vadd.f32 %v1250, %v748
        %v1259 = vmax.f32 %v1255, 0.0
        %v1260 = vmax.f32 %v1256, 0.0
        %v1261 = vmax.f32 %v1257, 0.0
        %v1262 = vmax.f32 %v1258, 0.0
        %v1263 = vmul.f32 %v1259, %v768
        %v1264 = vmul.f32 %v1260, %v772
        %v1265 = vmul.f32 %v1261, %v776
        %v1266 = vmul.f32 %v1262, %v780
        %v1267 = vadd.f32 %v1263, %v1264
        %v1268 = vadd.f32 %v1267, %v1265
        %v1269 = vadd.f32 %v1268, %v1266
        %v1270 = vadd.f32 %v1269, %v789
        %vm1271 = vcmp.gt.f32.partialorder %v1270, 0.0
        %v1272 = vsel %vm1271, 1, 0
        %v1273 = vcvt.s32.f32 %v1272
        %v1274 = vmul.f32 %v1253, 0.35355338
        %v1275 = vmul.f32 %v1274, %v1273
        %v1276 = vmul.f32 %v1275, %v671
        %v1277 = vmul.f32 %v1276, %v1276
        %1278 = vadd.xlane.f32.xlu0 %v1277
        %v1279 = vpop.xlane.xlu0 %1278
        %v1280 = vmax.f32 %v1279, 1e-24
        %v1281 = vrcp.pop %v1280
        %v1282 = vmul.f32 %v1280, %v1281
        %v1283 = vsub.f32 1.0, %v1282
        %v1284 = vmul.f32 %v1281, %v1283
        %v1285 = vadd.f32 %v1281, %v1284
        %vm1286 = vweird.f32 %v1280
        %vm1287 = vweird.f32 %v1281
        %vm1288 = vmor %vm1286, %vm1287
        %v1289 = vsel %vm1288, %v1281, %v1285
        %v1290 = vand.u32 2147483647, %v1280
        %vm1291 = vcmp.eq.f32.partialorder %v1290, 8.507059e+37
        %v1292 = vand.u32 %v1280, 2147483648
        %v1293 = vor.u32 1.1754944e-38, %v1292
        %v1294 = vsel %vm1291, %v1293, %v1289
        %v1295 = vadd.f32 %v1199, %v1273
        %v1296 = vmul.f32 %v1277, %v1294
        %v1297 = vadd.f32 %v1201, %v1296
        %v1298 = vld [vmem:[#allocation3 + $0x30] sm:$0xff]
        %1299 = vrot.lane.b32.xlu0 %v672, 80
        %v1300 = vpop.permute.xlu0 %1299
        %1301 = vrot.lane.b32.xlu0 %v673, 80
        %v1302 = vpop.permute.xlu0 %1301
        %1303 = vrot.lane.b32.xlu0 %v674, 80
        %v1304 = vpop.permute.xlu0 %1303
        %1305 = vrot.lane.b32.xlu0 %v675, 80
        %v1306 = vpop.permute.xlu0 %1305
        %1307 = vrot.lane.b32.xlu0 %v676, 80
        %v1308 = vpop.permute.xlu0 %1307
        %v1309 = vsel %vm678, %v1300, 0
        %v1311 = vsel %vm678, %v1302, 0
        %v1313 = vsel %vm678, %v1304, 0
        %v1315 = vsel %vm678, %v1306, 0
        %v1317 = vsel %vm678, %v1308, 0
        %1319 = vmatpush.msra.mxu0 0.0
        %1320 = vmatpush.msra.mxu0 0.0
        %1321 = vmatpush.msra.mxu0 0.0
        %1322 = vmatpush.msra.mxu0 0.0
        %1323 = vmatpush.msra.mxu0 0.0
        %1324 = vmatpush.msra.mxu0 0.0
        %1325 = vmatpush.msra.mxu0 0.0
        %1326 = vmatpush.msra.mxu0 0.0
        %1327 = vmatpush.msra.mxu0 0.0
        %1328 = vmatpush.msra.mxu0 0.0
        %1329 = vmatpush.msra.mxu0 0.0
        %1330 = vmatpush.msra.mxu0 0.0
        %1331 = vmatpush.msra.mxu0 0.0
        %1332 = vmatpush.msra.mxu0 0.0
        %1333 = vmatpush.msra.mxu0 0.0
        %1334 = vmatpush.msra.mxu0 %v1298
        %1335 = vmatmul.f32.gmra.mxu0 %v1309
        %v1336 = vpop.f32.mrf.mxu0
        %v1337 = vadd.f32 0.0, %v1336
        %1338 = vmatmul.f32.gmra.mxu0 %v1311
        %v1339 = vpop.f32.mrf.mxu0
        %v1340 = vadd.f32 0.0, %v1339
        %1341 = vmatmul.f32.gmra.mxu0 %v1313
        %v1342 = vpop.f32.mrf.mxu0
        %v1343 = vadd.f32 0.0, %v1342
        %1344 = vmatmul.f32.gmra.mxu0 %v1315
        %v1345 = vpop.f32.mrf.mxu0
        %v1346 = vadd.f32 0.0, %v1345
        %1347 = vmatmul.f32.gmra.mxu0 %v1317
        %v1348 = vpop.f32.mrf.mxu0
        %v1349 = vadd.f32 0.0, %v1348
        %1350 = vdwg.mxu0
        %v1351 = vadd.f32 %v1337, %v736
        %v1352 = vadd.f32 %v1340, %v740
        %v1353 = vadd.f32 %v1343, %v744
        %v1354 = vadd.f32 %v1346, %v748
        %v1355 = vmax.f32 %v1351, 0.0
        %v1356 = vmax.f32 %v1352, 0.0
        %v1357 = vmax.f32 %v1353, 0.0
        %v1358 = vmax.f32 %v1354, 0.0
        %v1359 = vmul.f32 %v1355, %v768
        %v1360 = vmul.f32 %v1356, %v772
        %v1361 = vmul.f32 %v1357, %v776
        %v1362 = vmul.f32 %v1358, %v780
        %v1363 = vadd.f32 %v1359, %v1360
        %v1364 = vadd.f32 %v1363, %v1361
        %v1365 = vadd.f32 %v1364, %v1362
        %v1366 = vadd.f32 %v1365, %v789
        %vm1367 = vcmp.gt.f32.partialorder %v1366, 0.0
        %v1368 = vsel %vm1367, 1, 0
        %v1369 = vcvt.s32.f32 %v1368
        %v1370 = vmul.f32 %v1349, 0.35355338
        %v1371 = vmul.f32 %v1370, %v1369
        %v1372 = vmul.f32 %v1371, %v671
        %v1373 = vmul.f32 %v1372, %v1372
        %1374 = vadd.xlane.f32.xlu0 %v1373
        %v1375 = vpop.xlane.xlu0 %1374
        %v1376 = vmax.f32 %v1375, 1e-24
        %v1377 = vrcp.pop %v1376
        %v1378 = vmul.f32 %v1376, %v1377
        %v1379 = vsub.f32 1.0, %v1378
        %v1380 = vmul.f32 %v1377, %v1379
        %v1381 = vadd.f32 %v1377, %v1380
        %vm1382 = vweird.f32 %v1376
        %vm1383 = vweird.f32 %v1377
        %vm1384 = vmor %vm1382, %vm1383
        %v1385 = vsel %vm1384, %v1377, %v1381
        %v1386 = vand.u32 2147483647, %v1376
        %vm1387 = vcmp.eq.f32.partialorder %v1386, 8.507059e+37
        %v1388 = vand.u32 %v1376, 2147483648
        %v1389 = vor.u32 1.1754944e-38, %v1388
        %v1390 = vsel %vm1387, %v1389, %v1385
        %v1391 = vadd.f32 %v1295, %v1369
        %v1392 = vmul.f32 %v1373, %v1390
        %v1393 = vadd.f32 %v1297, %v1392
        %v1394 = vld [vmem:[#allocation3 + $0x38] sm:$0xff]
        %1395 = vrot.lane.b32.xlu0 %v672, 72
        %v1396 = vpop.permute.xlu0 %1395
        %1397 = vrot.lane.b32.xlu0 %v673, 72
        %v1398 = vpop.permute.xlu0 %1397
        %1399 = vrot.lane.b32.xlu0 %v674, 72
        %v1400 = vpop.permute.xlu0 %1399
        %1401 = vrot.lane.b32.xlu0 %v675, 72
        %v1402 = vpop.permute.xlu0 %1401
        %1403 = vrot.lane.b32.xlu0 %v676, 72
        %v1404 = vpop.permute.xlu0 %1403
        %v1405 = vsel %vm678, %v1396, 0
        %v1407 = vsel %vm678, %v1398, 0
        %v1409 = vsel %vm678, %v1400, 0
        %v1411 = vsel %vm678, %v1402, 0
        %v1413 = vsel %vm678, %v1404, 0
        %1415 = vmatpush.msra.mxu0 0.0
        %1416 = vmatpush.msra.mxu0 0.0
        %1417 = vmatpush.msra.mxu0 0.0
        %1418 = vmatpush.msra.mxu0 0.0
        %1419 = vmatpush.msra.mxu0 0.0
        %1420 = vmatpush.msra.mxu0 0.0
        %1421 = vmatpush.msra.mxu0 0.0
        %1422 = vmatpush.msra.mxu0 0.0
        %1423 = vmatpush.msra.mxu0 0.0
        %1424 = vmatpush.msra.mxu0 0.0
        %1425 = vmatpush.msra.mxu0 0.0
        %1426 = vmatpush.msra.mxu0 0.0
        %1427 = vmatpush.msra.mxu0 0.0
        %1428 = vmatpush.msra.mxu0 0.0
        %1429 = vmatpush.msra.mxu0 0.0
        %1430 = vmatpush.msra.mxu0 %v1394
        %1431 = vmatmul.f32.gmra.mxu0 %v1405
        %v1432 = vpop.f32.mrf.mxu0
        %v1433 = vadd.f32 0.0, %v1432
        %1434 = vmatmul.f32.gmra.mxu0 %v1407
        %v1435 = vpop.f32.mrf.mxu0
        %v1436 = vadd.f32 0.0, %v1435
        %1437 = vmatmul.f32.gmra.mxu0 %v1409
        %v1438 = vpop.f32.mrf.mxu0
        %v1439 = vadd.f32 0.0, %v1438
        %1440 = vmatmul.f32.gmra.mxu0 %v1411
        %v1441 = vpop.f32.mrf.mxu0
        %v1442 = vadd.f32 0.0, %v1441
        %1443 = vmatmul.f32.gmra.mxu0 %v1413
        %v1444 = vpop.f32.mrf.mxu0
        %v1445 = vadd.f32 0.0, %v1444
        %1446 = vdwg.mxu0
        %v1447 = vadd.f32 %v1433, %v736
        %v1448 = vadd.f32 %v1436, %v740
        %v1449 = vadd.f32 %v1439, %v744
        %v1450 = vadd.f32 %v1442, %v748
        %v1451 = vmax.f32 %v1447, 0.0
        %v1452 = vmax.f32 %v1448, 0.0
        %v1453 = vmax.f32 %v1449, 0.0
        %v1454 = vmax.f32 %v1450, 0.0
        %v1455 = vmul.f32 %v1451, %v768
        %v1456 = vmul.f32 %v1452, %v772
        %v1457 = vmul.f32 %v1453, %v776
        %v1458 = vmul.f32 %v1454, %v780
        %v1459 = vadd.f32 %v1455, %v1456
        %v1460 = vadd.f32 %v1459, %v1457
        %v1461 = vadd.f32 %v1460, %v1458
        %v1462 = vadd.f32 %v1461, %v789
        %vm1463 = vcmp.gt.f32.partialorder %v1462, 0.0
        %v1464 = vsel %vm1463, 1, 0
        %v1465 = vcvt.s32.f32 %v1464
        %v1466 = vmul.f32 %v1445, 0.35355338
        %v1467 = vmul.f32 %v1466, %v1465
        %v1468 = vmul.f32 %v1467, %v671
        %v1469 = vmul.f32 %v1468, %v1468
        %1470 = vadd.xlane.f32.xlu0 %v1469
        %v1471 = vpop.xlane.xlu0 %1470
        %v1472 = vmax.f32 %v1471, 1e-24
        %v1473 = vrcp.pop %v1472
        %v1474 = vmul.f32 %v1472, %v1473
        %v1475 = vsub.f32 1.0, %v1474
        %v1476 = vmul.f32 %v1473, %v1475
        %v1477 = vadd.f32 %v1473, %v1476
        %vm1478 = vweird.f32 %v1472
        %vm1479 = vweird.f32 %v1473
        %vm1480 = vmor %vm1478, %vm1479
        %v1481 = vsel %vm1480, %v1473, %v1477
        %v1482 = vand.u32 2147483647, %v1472
        %vm1483 = vcmp.eq.f32.partialorder %v1482, 8.507059e+37
        %v1484 = vand.u32 %v1472, 2147483648
        %v1485 = vor.u32 1.1754944e-38, %v1484
        %v1486 = vsel %vm1483, %v1485, %v1481
        %v1487 = vadd.f32 %v1391, %v1465
        %v1488 = vmul.f32 %v1469, %v1486
        %v1489 = vadd.f32 %v1393, %v1488
        %v1490 = vmul.f32 %v1487, 0.125
        %1491 = vst [vmem:[%s397] sm:$0xff] %v1490
        %v1492 = vmul.f32 %v1489, 0.125
        %1493 = vst [vmem:[%s404] sm:$0xff] %v1492
        %s1494 = sand.u32 %s258, 1
        %s1495 = scalar_lea.sflag [#allocation6], %s1494
        %s1496 = sand.u32 %s258, 1
        %s1497 = smul.addr %s1496, 8
        %s1498 = scalar_lea.vmem [#allocation5], %s1497
        %s1499 = sand.u32 %s284, 1
        %s1500 = scalar_lea.sflag [#allocation8], %s1499
        %s1501 = sand.u32 %s284, 1
        %s1502 = smul.addr %s1501, 8
        %s1503 = scalar_lea.vmem [#allocation7], %s1502
        // Predicated region
        $region61: #{sanet_forward.1} parent=59 // pred_check
          %p1504 = pneg %p268
        $region62: #{sanet_forward.1} parent=59 // pred_check_branch
          %1506 = sbr.rel (%p1504) target = $region64
        $region63: #{sanet_forward.1} parent=59 // pred_region
          %1508 = vsyncadd %s1495, 0
          %s1509 = smul.addr %s30, 8
          %s1510 = scalar_lea.hbm %s10, %s1509
          %s1512 = sshll.u32 %s1498, 4
          %s1513 = int_to_ptr.vmem [resolvable:$true] %s1512
          %s1514 = sshll.u32 %s1510, 4
          %s1515 = int_to_ptr.hbm [resolvable:$true] %s1514
          %1517 = dma.vmem_to_hbm [thread:$0]  %s1513, 128, %s1515, %s1495
        $region64: #{sanet_forward.1} parent=59 // pred_fallthru
          _
        // Predicated region
        $region65: #{sanet_forward.1} parent=59 // pred_check
          %p1518 = pneg %p294
        $region66: #{sanet_forward.1} parent=59 // pred_check_branch
          %1520 = sbr.rel (%p1518) target = $region68
        $region67: #{sanet_forward.1} parent=59 // pred_region
          %1522 = vsyncadd %s1500, 0
          %s1523 = smul.addr %s30, 8
          %s1524 = scalar_lea.hbm %s11, %s1523
          %s1526 = sshll.u32 %s1503, 4
          %s1527 = int_to_ptr.vmem [resolvable:$true] %s1526
          %s1528 = sshll.u32 %s1524, 4
          %s1529 = int_to_ptr.hbm [resolvable:$true] %s1528
          %1531 = dma.vmem_to_hbm [thread:$0]  %s1527, 128, %s1529, %s1500
        $region68: #{sanet_forward.1} parent=59 // pred_fallthru
          _
      $region60: #{sanet_forward.1} parent=5 // pred_fallthru
        _
      %p1532 = scmp.le.s32.totalorder 2, %s25
      // Predicated region
      $region69: #{sanet_forward.1} parent=5 // pred_check
        %p1533 = pneg %p1532
      $region70: #{sanet_forward.1} parent=5 // pred_check_branch
        %1535 = sbr.rel (%p1533) target = $region72
      $region71: #{sanet_forward.1} parent=5 // pred_region
        %s1536 = ssub.s32 %s25, 2
        // Predicated region
        $region73: #{sanet_forward.1} parent=71 // pred_check
          %p1537 = pneg %p274
        $region74: #{sanet_forward.1} parent=71 // pred_check_branch
          %1539 = sbr.rel (%p1537) target = $region76
        $region75: #{sanet_forward.1} parent=71 // pred_region
          %s1540 = sand.u32 %s259, 1
          %s1541 = scalar_lea.sflag [#allocation6], %s1540
          %s1542 = sand.u32 %s259, 1
          %s1543 = smul.addr %s1542, 8
          %s1544 = scalar_lea.vmem [#allocation5], %s1543
          %1546 = dma.done %s1541, 128
        $region76: #{sanet_forward.1} parent=71 // pred_fallthru
          _
        // Predicated region
        $region77: #{sanet_forward.1} parent=71 // pred_check
          %p1547 = pneg %p300
        $region78: #{sanet_forward.1} parent=71 // pred_check_branch
          %1549 = sbr.rel (%p1547) target = $region80
        $region79: #{sanet_forward.1} parent=71 // pred_region
          %s1550 = sand.u32 %s285, 1
          %s1551 = scalar_lea.sflag [#allocation8], %s1550
          %s1552 = sand.u32 %s285, 1
          %s1553 = smul.addr %s1552, 8
          %s1554 = scalar_lea.vmem [#allocation7], %s1553
          %1556 = dma.done %s1551, 128
        $region80: #{sanet_forward.1} parent=71 // pred_fallthru
          _
      $region72: #{sanet_forward.1} parent=5 // pred_fallthru
        _
    $region6: #{sanet_forward.1} parent=1 // loop_footer
      %s29 = sadd.s32 1, %s25
    $region7: #{sanet_forward.1} parent=1 // loop_footer_branch
      %24 = sbr.rel target = $region3
    $region8: #{sanet_forward.1} parent=1 // loop_exit
      _
    %1557 = vsyncpa [#allocation6], 1
    %s1558 = scalar_lea.sflag [#allocation6], 1
    %1559 = vsyncpa %s1558, 1
    %1560 = vsyncpa [#allocation8], 1
    %s1561 = scalar_lea.sflag [#allocation8], 1
    %1562 = vsyncpa %s1561, 1

</llo_original>
